<compile_context>
chip_gen: v7x
topology: tpu7x:2x2x1
jax: 0.10.0
libtpu: 0.0.40
codegen_flags: <defaults>
</compile_context>

<pallas_src>
import functools

import jax
import jax.numpy as jnp
from jax.experimental import pallas as pl
from jax.experimental.pallas import tpu as pltpu

BN_EPS = 1e-5


# ----------------------------------------------------------------------------
# Kernel
# ----------------------------------------------------------------------------
def dsconv_kernel(xm_ref, xh_ref, wd_ref, s1_ref, b1_ref, a1_ref,
                  wp_ref, s2_ref, b2_ref, a2_ref, o_ref, xpad_ref,
                  *, kh, kw):
    # xm_ref : (TN, TH,   Wp, Cin_p)  bf16  main input rows of this tile
    # xh_ref : (TN, HALO, Wp, Cin_p)  bf16  halo rows (next KH-1 padded rows)
    # wd_ref : (KH*KW, Cin_p)         f32   depthwise taps (channel-last)
    # wp_ref : (Cin_p, Cout_p)        bf16  pointwise weight
    # s*/b*/a* : (1, C)               f32   folded-BN scale/shift, PReLU slopes
    # o_ref  : (TN, TH, W_out_p, Cout_p) bf16
    # xpad_ref: (TN, TH+HALO, Wp, Cin_p) f32 scratch (main+halo staged once)
    tn, th, _, cin = xm_ref.shape
    w_out = o_ref.shape[2]
    cout = o_ref.shape[3]

    # Stage the bf16 main + halo rows into one f32 VMEM tile.
    xpad_ref[:, 0:th, :, :] = xm_ref[...].astype(jnp.float32)
    xpad_ref[:, th:, :, :] = xh_ref[...].astype(jnp.float32)

    wd = wd_ref[...]                                    # (KH*KW, Cin_p) f32

    # --- depthwise conv: KH*KW shifted taps, per-channel MAC on the VPU ---
    acc = jnp.zeros((tn, th, w_out, cin), jnp.float32)
    for i in range(kh):
        for j in range(kw):
            t = i * kw + j
            tap = xpad_ref[:, i:i + th, j:j + w_out, :]
            acc = acc + tap * wd[t:t + 1, :]            # (1, Cin_p) broadcast

    # --- BN1 (folded) + PReLU1 (f32) ---
    y = acc * s1_ref[...] + b1_ref[...]
    y = jnp.where(y >= 0.0, y, a1_ref[...] * y)

    # --- pointwise 1x1 conv: single bf16 x bf16 -> f32 MXU matmul ---
    y2 = y.astype(jnp.bfloat16).reshape(tn * th * w_out, cin)
    z = jnp.dot(y2, wp_ref[...], preferred_element_type=jnp.float32)

    # --- BN2 (folded) + PReLU2 ---
    z = z * s2_ref[...] + b2_ref[...]
    z = jnp.where(z >= 0.0, z, a2_ref[...] * z)

    o_ref[...] = z.reshape(tn, th, w_out, cout).astype(o_ref.dtype)


# ----------------------------------------------------------------------------
# Helpers
# ----------------------------------------------------------------------------
def _round_up(x, m):
    return ((x + m - 1) // m) * m


def _vmem_capacity_bytes():
    """Physical VMEM per TensorCore (128 MiB v5e/v6e, 64 MiB v7x)."""
    try:
        info = pltpu.get_tpu_info()
        cap = getattr(info, "vmem_capacity_bytes", None)
        if cap:
            return int(cap)
    except Exception:
        pass
    return 128 << 20


def _pad1(v, c):
    """(C,) -> (1, C_pad) f32, zero-padded on the channel axis."""
    v = v.astype(jnp.float32).reshape(1, -1)
    return jnp.pad(v, ((0, 0), (0, c - v.shape[1])))


def _select_tiles(n, h_out, halo, step_bytes_fn, budget):
    """Pick (TN, TH, H_out_pad): biggest per-step footprint under the VMEM
    budget, preferring >= 4 grid steps (pipelining + v7x megacore) and no
    wasted H padding.  TH is a multiple of `halo` so the halo rows stay
    Blocked-indexable."""
    tn_cands = [t for t in range(1, n + 1) if n % t == 0]
    th_cands = list(range(halo, _round_up(h_out, halo) + 1, halo))
    best, best_key = None, None
    for tn in tn_cands:
        for th in th_cands:
            h_pad = _round_up(h_out, th)
            steps = (n // tn) * (h_pad // th)
            waste = h_pad - h_out
            nbytes = step_bytes_fn(tn, th)
            fits = nbytes <= budget
            key = (fits, min(steps, 4), -waste, nbytes if fits else -nbytes, th)
            if best_key is None or key > best_key:
                best_key, best = key, (tn, th, h_pad)
    return best


# ----------------------------------------------------------------------------
# NHWC-native forward (keep NHWC end-to-end across a stack of these blocks)
# ----------------------------------------------------------------------------
def dsconv_forward_nhwc(x, dw_w, pw_w,
                        gamma1, beta1, mean1, var1, alpha1,
                        gamma2, beta2, mean2, var2, alpha2,
                        *, padding):
    """x: (N, H, W, Cin) NHWC.  Returns (N, H_out, W_out, Cout) NHWC float32."""
    N, H, W, Cin = x.shape
    KH, KW = int(dw_w.shape[2]), int(dw_w.shape[3])
    Cout = int(pw_w.shape[0])
    P = int(padding)

    H_out = H + 2 * P - KH + 1           # stride fixed at 1
    W_out = W + 2 * P - KW + 1

    # Lane-dense channel padding; 8-aligned output width for layout-preserving
    # reshapes around the MXU matmul.
    Cin_p = _round_up(Cin, 128)
    Cout_p = _round_up(Cout, 128)
    W_out_p = _round_up(W_out, 8)
    W_in_p = W_out_p + KW - 1
    HALO = max(KH - 1, 1)

    # Chip-aware VMEM budget (v5e/v6e: 128 MiB physical; v7x: 64 MiB).
    phys_vmem = _vmem_capacity_bytes()
    scoped_vmem = min(64 << 20, (phys_vmem * 3) // 4)    # 64 MiB v5e/v6e, 48 MiB v7x
    budget = int(scoped_vmem * 0.7)                      # headroom for spills/scratch

    act = 2  # bf16 activation bytes

    def step_bytes(tn, th):
        x_main = tn * th * W_in_p * Cin_p * act
        x_halo = tn * HALO * W_in_p * Cin_p * act
        o_blk = tn * th * W_out_p * Cout_p * act
        pipeline = 2 * (x_main + x_halo + o_blk)          # double-buffered blocks
        xpad_f32 = tn * (th + HALO) * W_in_p * Cin_p * 4  # f32 scratch tile
        acc_f32 = tn * th * W_out_p * Cin_p * 4
        y_bf16 = tn * th * W_out_p * Cin_p * act
        z_f32 = tn * th * W_out_p * Cout_p * 4
        weights = 2 * (KH * KW * Cin_p * 4 + Cin_p * Cout_p * act
                       + 3 * Cin_p * 4 + 3 * Cout_p * 4)
        return pipeline + xpad_f32 + acc_f32 + y_bf16 + z_f32 + weights

    TN, TH, H_out_p = _select_tiles(N, H_out, HALO, step_bytes, budget)
    H_in_p = H_out_p + HALO

    # Single fused boundary-prep op: spatial halo pad + channel pad + bf16 cast.
    x_p = jnp.pad(x.astype(jnp.float32),
                  ((0, 0), (P, H_in_p - H - P), (P, W_in_p - W - P),
                   (0, Cin_p - Cin))).astype(jnp.bfloat16)

    # Weights: depthwise -> (KH*KW, Cin_p) f32, pointwise -> (Cin_p, Cout_p) bf16.
    wd = jnp.transpose(dw_w.reshape(Cin, KH, KW), (1, 2, 0)).reshape(KH * KW, Cin)
    wd = jnp.pad(wd, ((0, 0), (0, Cin_p - Cin))).astype(jnp.float32)
    wp = jnp.transpose(pw_w.reshape(Cout, Cin), (1, 0))
    wp = jnp.pad(wp, ((0, Cin_p - Cin), (0, Cout_p - Cout))).astype(jnp.bfloat16)

    # Fold eval-mode BatchNorm into per-channel scale/shift, once, outside the grid.
    inv1 = jax.lax.rsqrt(var1.astype(jnp.float32) + BN_EPS)
    inv2 = jax.lax.rsqrt(var2.astype(jnp.float32) + BN_EPS)
    s1 = _pad1(gamma1 * inv1, Cin_p)
    b1 = _pad1(beta1 - mean1 * gamma1 * inv1, Cin_p)
    a1 = _pad1(alpha1, Cin_p)
    s2 = _pad1(gamma2 * inv2, Cout_p)
    b2 = _pad1(beta2 - mean2 * gamma2 * inv2, Cout_p)
    a2 = _pad1(alpha2, Cout_p)

    halo_step = TH // HALO     # halo rows start at (h+1)*TH = ((h+1)*halo_step) * HALO
    kernel = functools.partial(dsconv_kernel, kh=KH, kw=KW)

    out = pl.pallas_call(
        kernel,
        out_shape=jax.ShapeDtypeStruct((N, H_out_p, W_out_p, Cout_p), jnp.bfloat16),
        grid_spec=pltpu.PrefetchScalarGridSpec(
            num_scalar_prefetch=0,
            grid=(N // TN, H_out_p // TH),
            in_specs=[
                # main rows [h*TH, h*TH + TH)
                pl.BlockSpec((TN, TH, W_in_p, Cin_p), lambda b, h: (b, h, 0, 0)),
                # halo rows [(h+1)*TH, (h+1)*TH + HALO)   (same array, 2nd spec)
                pl.BlockSpec((TN, HALO, W_in_p, Cin_p),
                             lambda b, h: (b, (h + 1) * halo_step, 0, 0)),
                pl.BlockSpec((KH * KW, Cin_p), lambda b, h: (0, 0)),
                pl.BlockSpec((1, Cin_p), lambda b, h: (0, 0)),
                pl.BlockSpec((1, Cin_p), lambda b, h: (0, 0)),
                pl.BlockSpec((1, Cin_p), lambda b, h: (0, 0)),
                pl.BlockSpec((Cin_p, Cout_p), lambda b, h: (0, 0)),
                pl.BlockSpec((1, Cout_p), lambda b, h: (0, 0)),
                pl.BlockSpec((1, Cout_p), lambda b, h: (0, 0)),
                pl.BlockSpec((1, Cout_p), lambda b, h: (0, 0)),
            ],
            out_specs=pl.BlockSpec((TN, TH, W_out_p, Cout_p),
                                   lambda b, h: (b, h, 0, 0)),
            scratch_shapes=[pltpu.VMEM((TN, TH + HALO, W_in_p, Cin_p), jnp.float32)],
        ),
        compiler_params=pltpu.CompilerParams(
            dimension_semantics=("parallel", "parallel"),
            vmem_limit_bytes=int(scoped_vmem)),
    )(x_p, x_p, wd, s1, b1, a1, wp, s2, b2, a2)

    if (H_out_p, W_out_p, Cout_p) != (H_out, W_out, Cout):
        out = out[:, :H_out, :W_out, :Cout]
    return out.astype(jnp.float32)


# ----------------------------------------------------------------------------
# PyTorch-layout boundary wrapper (NCHW in / NCHW out).  In a stack of these
# blocks, call dsconv_forward_nhwc directly and convert only at model edges.
# ----------------------------------------------------------------------------
def dsconv_forward(x, dw_w, pw_w,
                   gamma1, beta1, mean1, var1, alpha1,
                   gamma2, beta2, mean2, var2, alpha2,
                   *, padding):
    """x: (N, Cin, H, W); dw_w: (Cin, 1, KH, KW); pw_w: (Cout, Cin, 1, 1)."""
    x_nhwc = jnp.transpose(x, (0, 2, 3, 1))
    out_nhwc = dsconv_forward_nhwc(x_nhwc, dw_w, pw_w,
                                   gamma1, beta1, mean1, var1, alpha1,
                                   gamma2, beta2, mean2, var2, alpha2,
                                   padding=padding)
    return jnp.transpose(out_nhwc, (0, 3, 1, 2))


# ----------------------------------------------------------------------------
# Pure-JAX reference (PyTorch eval-mode semantics, exact f32 math)
# ----------------------------------------------------------------------------
def dsconv_reference(x, dw_w, pw_w,
                     gamma1, beta1, mean1, var1, alpha1,
                     gamma2, beta2, mean2, var2, alpha2, *, padding):
    N, Cin, H, W = x.shape
    KH, KW = dw_w.shape[2], dw_w.shape[3]
    Cout = pw_w.shape[0]
    P = padding
    H_out = H + 2 * P - KH + 1
    W_out = W + 2 * P - KW + 1

    xp = jnp.pad(x, ((0, 0), (0, 0), (P, P), (P, P)))
    y = jnp.zeros((N, Cin, H_out, W_out), jnp.float32)
    for i in range(KH):
        for j in range(KW):
            y = y + xp[:, :, i:i + H_out, j:j + W_out] * dw_w[:, 0, i, j][None, :, None, None]

    y = (y - mean1[None, :, None, None]) * (gamma1 / jnp.sqrt(var1 + BN_EPS))[None, :, None, None] \
        + beta1[None, :, None, None]
    y = jnp.where(y >= 0, y, alpha1[None, :, None, None] * y)

    z = jnp.sum(y[:, None, :, :, :] * pw_w[None, :, :, 0:1, 0:1], axis=2)

    z = (z - mean2[None, :, None, None]) * (gamma2 / jnp.sqrt(var2 + BN_EPS))[None, :, None, None] \
        + beta2[None, :, None, None]
    z = jnp.where(z >= 0, z, alpha2[None, :, None, None] * z)
    return z


if __name__ == "__main__":
    # Small shapes consistent with the module: in_planes=4, out_planes=8,
    # kernel_size=3, padding=1, 16x16 feature map, batch=2.
    N, Cin, Cout, H, W = 2, 4, 8, 16, 16
    KH = KW = 3
    padding = 1

    key = jax.random.PRNGKey(0)
    keys = jax.random.split(key, 11)

    x = jax.random.normal(keys[0], (N, Cin, H, W), dtype=jnp.float32)
    dw_w = jax.random.normal(keys[1], (Cin, 1, KH, KW), dtype=jnp.float32) * 0.2
    pw_w = jax.random.normal(keys[2], (Cout, Cin, 1, 1), dtype=jnp.float32) * 0.2
    gamma1 = 1.0 + 0.1 * jax.random.normal(keys[3], (Cin,), dtype=jnp.float32)
    beta1 = 0.1 * jax.random.normal(keys[4], (Cin,), dtype=jnp.float32)
    mean1 = 0.1 * jax.random.normal(keys[5], (Cin,), dtype=jnp.float32)
    var1 = jnp.abs(jax.random.normal(keys[6], (Cin,), dtype=jnp.float32)) + 0.5
    alpha1 = jnp.full((Cin,), 0.25, dtype=jnp.float32)   # PReLU init=0.25
    gamma2 = 1.0 + 0.1 * jax.random.normal(keys[7], (Cout,), dtype=jnp.float32)
    beta2 = 0.1 * jax.random.normal(keys[8], (Cout,), dtype=jnp.float32)
    mean2 = 0.1 * jax.random.normal(keys[9], (Cout,), dtype=jnp.float32)
    var2 = jnp.abs(jax.random.normal(keys[10], (Cout,), dtype=jnp.float32)) + 0.5
    alpha2 = jnp.full((Cout,), 0.25, dtype=jnp.float32)

    out = dsconv_forward(x, dw_w, pw_w,
                         gamma1, beta1, mean1, var1, alpha1,
                         gamma2, beta2, mean2, var2, alpha2,
                         padding=padding)
    out = jax.block_until_ready(out)

    # The kernel keeps activations bf16 in HBM; compare against an exact-f32
    # reference fed the same bf16-rounded input (remaining diff = bf16 matmul
    # operands + bf16 output store), with a bf16-appropriate tolerance.
    x_bf = x.astype(jnp.bfloat16).astype(jnp.float32)
    ref = dsconv_reference(x_bf, dw_w, pw_w,
                           gamma1, beta1, mean1, var1, alpha1,
                           gamma2, beta2, mean2, var2, alpha2,
                           padding=padding)

    assert out.shape == (N, Cout, H, W)
    assert jnp.allclose(out, ref, atol=2e-2, rtol=2e-2), "mismatch vs reference"

    print("KERNEL_OK")
</pallas_src>

<mosaic_0001>
module attributes {stable_mosaic.version = 11 : i64} {
  func.func @dsconv_kernel(%arg0: i32, %arg1: i32, %arg2: memref<2x4x18x128xbf16, #tpu.memory_space<vmem>>, %arg3: memref<2x2x18x128xbf16, #tpu.memory_space<vmem>>, %arg4: memref<9x128xf32, #tpu.memory_space<vmem>>, %arg5: memref<1x128xf32, #tpu.memory_space<vmem>>, %arg6: memref<1x128xf32, #tpu.memory_space<vmem>>, %arg7: memref<1x128xf32, #tpu.memory_space<vmem>>, %arg8: memref<128x128xbf16, #tpu.memory_space<vmem>>, %arg9: memref<1x128xf32, #tpu.memory_space<vmem>>, %arg10: memref<1x128xf32, #tpu.memory_space<vmem>>, %arg11: memref<1x128xf32, #tpu.memory_space<vmem>>, %arg12: memref<2x4x16x128xbf16, #tpu.memory_space<vmem>>, %arg13: memref<2x6x18x128xf32, #tpu.memory_space<vmem>>) attributes {dimension_semantics = [#tpu.dimension_semantics<parallel>, #tpu.dimension_semantics<parallel>], iteration_bounds = array<i64: 1, 4>, scalar_prefetch = 0 : i64, scratch_operands = 1 : i64, tpu.core_type = #tpu.core_type<tc>, window_params = [{transform_indices = @transform_0, window_bounds = array<i64: 2, 4, 18, 128>}, {transform_indices = @transform_1, window_bounds = array<i64: 2, 2, 18, 128>}, {pipeline_mode = #tpu.pipeline_mode<synchronous>, transform_indices = @transform_2, window_bounds = array<i64: 9, 128>}, {pipeline_mode = #tpu.pipeline_mode<synchronous>, transform_indices = @transform_3, window_bounds = array<i64: 1, 128>}, {pipeline_mode = #tpu.pipeline_mode<synchronous>, transform_indices = @transform_4, window_bounds = array<i64: 1, 128>}, {pipeline_mode = #tpu.pipeline_mode<synchronous>, transform_indices = @transform_5, window_bounds = array<i64: 1, 128>}, {pipeline_mode = #tpu.pipeline_mode<synchronous>, transform_indices = @transform_6, window_bounds = array<i64: 128, 128>}, {pipeline_mode = #tpu.pipeline_mode<synchronous>, transform_indices = @transform_7, window_bounds = array<i64: 1, 128>}, {pipeline_mode = #tpu.pipeline_mode<synchronous>, transform_indices = @transform_8, window_bounds = array<i64: 1, 128>}, {pipeline_mode = #tpu.pipeline_mode<synchronous>, transform_indices = @transform_9, window_bounds = array<i64: 1, 128>}, {transform_indices = @transform_10, window_bounds = array<i64: 2, 4, 16, 128>}]} {
    %c0 = arith.constant 0 : index
    %c0_0 = arith.constant 0 : index
    %c0_1 = arith.constant 0 : index
    %c0_2 = arith.constant 0 : index
    %0 = vector.load %arg2[%c0, %c0_0, %c0_1, %c0_2] : memref<2x4x18x128xbf16, #tpu.memory_space<vmem>>, vector<2x4x18x128xbf16>
    %1 = arith.extf %0 : vector<2x4x18x128xbf16> to vector<2x4x18x128xf32>
    %c0_3 = arith.constant 0 : index
    %c0_4 = arith.constant 0 : index
    %c0_5 = arith.constant 0 : index
    %c0_6 = arith.constant 0 : index
    %2 = vector.load %arg13[%c0_3, %c0_4, %c0_5, %c0_6] : memref<2x6x18x128xf32, #tpu.memory_space<vmem>>, vector<2x4x18x128xf32>
    tpu.vector_store %arg13[%c0_3, %c0_4, %c0_5, %c0_6], %1 {strides = array<i32>} : memref<2x6x18x128xf32, #tpu.memory_space<vmem>>, vector<2x4x18x128xf32>,
    %c0_7 = arith.constant 0 : index
    %c0_8 = arith.constant 0 : index
    %c0_9 = arith.constant 0 : index
    %c0_10 = arith.constant 0 : index
    %3 = vector.load %arg3[%c0_7, %c0_8, %c0_9, %c0_10] : memref<2x2x18x128xbf16, #tpu.memory_space<vmem>>, vector<2x2x18x128xbf16>
    %4 = arith.extf %3 : vector<2x2x18x128xbf16> to vector<2x2x18x128xf32>
    %c0_11 = arith.constant 0 : index
    %c4 = arith.constant 4 : index
    %c0_12 = arith.constant 0 : index
    %c0_13 = arith.constant 0 : index
    %5 = vector.load %arg13[%c0_11, %c4, %c0_12, %c0_13] : memref<2x6x18x128xf32, #tpu.memory_space<vmem>>, vector<2x2x18x128xf32>
    tpu.vector_store %arg13[%c0_11, %c4, %c0_12, %c0_13], %4 {strides = array<i32>} : memref<2x6x18x128xf32, #tpu.memory_space<vmem>>, vector<2x2x18x128xf32>,
    %c0_14 = arith.constant 0 : index
    %c0_15 = arith.constant 0 : index
    %6 = vector.load %arg4[%c0_14, %c0_15] : memref<9x128xf32, #tpu.memory_space<vmem>>, vector<9x128xf32>
    %cst = arith.constant 0.000000e+00 : f32
    %7 = vector.broadcast %cst : f32 to vector<2x4x16x128xf32>
    %c0_16 = arith.constant 0 : index
    %c0_17 = arith.constant 0 : index
    %c0_18 = arith.constant 0 : index
    %c0_19 = arith.constant 0 : index
    %8 = vector.load %arg13[%c0_16, %c0_17, %c0_18, %c0_19] : memref<2x6x18x128xf32, #tpu.memory_space<vmem>>, vector<2x4x16x128xf32>
    %9 = vector.extract_strided_slice %6 {offsets = [0, 0], sizes = [1, 128], strides = [1, 1]} : vector<9x128xf32> to vector<1x128xf32>
    %10 = vector.shape_cast %9 : vector<1x128xf32> to vector<1x1x1x128xf32>
    %11 = vector.broadcast %10 : vector<1x1x1x128xf32> to vector<2x4x16x128xf32>
    %12 = arith.mulf %8, %11 : vector<2x4x16x128xf32>
    %13 = arith.addf %7, %12 : vector<2x4x16x128xf32>
    %c0_20 = arith.constant 0 : index
    %c0_21 = arith.constant 0 : index
    %c1 = arith.constant 1 : index
    %c0_22 = arith.constant 0 : index
    %14 = vector.load %arg13[%c0_20, %c0_21, %c1, %c0_22] : memref<2x6x18x128xf32, #tpu.memory_space<vmem>>, vector<2x4x16x128xf32>
    %15 = vector.extract_strided_slice %6 {offsets = [1, 0], sizes = [1, 128], strides = [1, 1]} : vector<9x128xf32> to vector<1x128xf32>
    %16 = vector.shape_cast %15 : vector<1x128xf32> to vector<1x1x1x128xf32>
    %17 = vector.broadcast %16 : vector<1x1x1x128xf32> to vector<2x4x16x128xf32>
    %18 = arith.mulf %14, %17 : vector<2x4x16x128xf32>
    %19 = arith.addf %13, %18 : vector<2x4x16x128xf32>
    %c0_23 = arith.constant 0 : index
    %c0_24 = arith.constant 0 : index
    %c2 = arith.constant 2 : index
    %c0_25 = arith.constant 0 : index
    %20 = vector.load %arg13[%c0_23, %c0_24, %c2, %c0_25] : memref<2x6x18x128xf32, #tpu.memory_space<vmem>>, vector<2x4x16x128xf32>
    %21 = vector.extract_strided_slice %6 {offsets = [2, 0], sizes = [1, 128], strides = [1, 1]} : vector<9x128xf32> to vector<1x128xf32>
    %22 = vector.shape_cast %21 : vector<1x128xf32> to vector<1x1x1x128xf32>
    %23 = vector.broadcast %22 : vector<1x1x1x128xf32> to vector<2x4x16x128xf32>
    %24 = arith.mulf %20, %23 : vector<2x4x16x128xf32>
    %25 = arith.addf %19, %24 : vector<2x4x16x128xf32>
    %c0_26 = arith.constant 0 : index
    %c1_27 = arith.constant 1 : index
    %c0_28 = arith.constant 0 : index
    %c0_29 = arith.constant 0 : index
    %26 = vector.load %arg13[%c0_26, %c1_27, %c0_28, %c0_29] : memref<2x6x18x128xf32, #tpu.memory_space<vmem>>, vector<2x4x16x128xf32>
    %27 = vector.extract_strided_slice %6 {offsets = [3, 0], sizes = [1, 128], strides = [1, 1]} : vector<9x128xf32> to vector<1x128xf32>
    %28 = vector.shape_cast %27 : vector<1x128xf32> to vector<1x1x1x128xf32>
    %29 = vector.broadcast %28 : vector<1x1x1x128xf32> to vector<2x4x16x128xf32>
    %30 = arith.mulf %26, %29 : vector<2x4x16x128xf32>
    %31 = arith.addf %25, %30 : vector<2x4x16x128xf32>
    %c0_30 = arith.constant 0 : index
    %c1_31 = arith.constant 1 : index
    %c1_32 = arith.constant 1 : index
    %c0_33 = arith.constant 0 : index
    %32 = vector.load %arg13[%c0_30, %c1_31, %c1_32, %c0_33] : memref<2x6x18x128xf32, #tpu.memory_space<vmem>>, vector<2x4x16x128xf32>
    %33 = vector.extract_strided_slice %6 {offsets = [4, 0], sizes = [1, 128], strides = [1, 1]} : vector<9x128xf32> to vector<1x128xf32>
    %34 = vector.shape_cast %33 : vector<1x128xf32> to vector<1x1x1x128xf32>
    %35 = vector.broadcast %34 : vector<1x1x1x128xf32> to vector<2x4x16x128xf32>
    %36 = arith.mulf %32, %35 : vector<2x4x16x128xf32>
    %37 = arith.addf %31, %36 : vector<2x4x16x128xf32>
    %c0_34 = arith.constant 0 : index
    %c1_35 = arith.constant 1 : index
    %c2_36 = arith.constant 2 : index
    %c0_37 = arith.constant 0 : index
    %38 = vector.load %arg13[%c0_34, %c1_35, %c2_36, %c0_37] : memref<2x6x18x128xf32, #tpu.memory_space<vmem>>, vector<2x4x16x128xf32>
    %39 = vector.extract_strided_slice %6 {offsets = [5, 0], sizes = [1, 128], strides = [1, 1]} : vector<9x128xf32> to vector<1x128xf32>
    %40 = vector.shape_cast %39 : vector<1x128xf32> to vector<1x1x1x128xf32>
    %41 = vector.broadcast %40 : vector<1x1x1x128xf32> to vector<2x4x16x128xf32>
    %42 = arith.mulf %38, %41 : vector<2x4x16x128xf32>
    %43 = arith.addf %37, %42 : vector<2x4x16x128xf32>
    %c0_38 = arith.constant 0 : index
    %c2_39 = arith.constant 2 : index
    %c0_40 = arith.constant 0 : index
    %c0_41 = arith.constant 0 : index
    %44 = vector.load %arg13[%c0_38, %c2_39, %c0_40, %c0_41] : memref<2x6x18x128xf32, #tpu.memory_space<vmem>>, vector<2x4x16x128xf32>
    %45 = vector.extract_strided_slice %6 {offsets = [6, 0], sizes = [1, 128], strides = [1, 1]} : vector<9x128xf32> to vector<1x128xf32>
    %46 = vector.shape_cast %45 : vector<1x128xf32> to vector<1x1x1x128xf32>
    %47 = vector.broadcast %46 : vector<1x1x1x128xf32> to vector<2x4x16x128xf32>
    %48 = arith.mulf %44, %47 : vector<2x4x16x128xf32>
    %49 = arith.addf %43, %48 : vector<2x4x16x128xf32>
    %c0_42 = arith.constant 0 : index
    %c2_43 = arith.constant 2 : index
    %c1_44 = arith.constant 1 : index
    %c0_45 = arith.constant 0 : index
    %50 = vector.load %arg13[%c0_42, %c2_43, %c1_44, %c0_45] : memref<2x6x18x128xf32, #tpu.memory_space<vmem>>, vector<2x4x16x128xf32>
    %51 = vector.extract_strided_slice %6 {offsets = [7, 0], sizes = [1, 128], strides = [1, 1]} : vector<9x128xf32> to vector<1x128xf32>
    %52 = vector.shape_cast %51 : vector<1x128xf32> to vector<1x1x1x128xf32>
    %53 = vector.broadcast %52 : vector<1x1x1x128xf32> to vector<2x4x16x128xf32>
    %54 = arith.mulf %50, %53 : vector<2x4x16x128xf32>
    %55 = arith.addf %49, %54 : vector<2x4x16x128xf32>
    %c0_46 = arith.constant 0 : index
    %c2_47 = arith.constant 2 : index
    %c2_48 = arith.constant 2 : index
    %c0_49 = arith.constant 0 : index
    %56 = vector.load %arg13[%c0_46, %c2_47, %c2_48, %c0_49] : memref<2x6x18x128xf32, #tpu.memory_space<vmem>>, vector<2x4x16x128xf32>
    %57 = vector.extract_strided_slice %6 {offsets = [8, 0], sizes = [1, 128], strides = [1, 1]} : vector<9x128xf32> to vector<1x128xf32>
    %58 = vector.shape_cast %57 : vector<1x128xf32> to vector<1x1x1x128xf32>
    %59 = vector.broadcast %58 : vector<1x1x1x128xf32> to vector<2x4x16x128xf32>
    %60 = arith.mulf %56, %59 : vector<2x4x16x128xf32>
    %61 = arith.addf %55, %60 : vector<2x4x16x128xf32>
    %c0_50 = arith.constant 0 : index
    %c0_51 = arith.constant 0 : index
    %62 = vector.load %arg5[%c0_50, %c0_51] : memref<1x128xf32, #tpu.memory_space<vmem>>, vector<1x128xf32>
    %63 = vector.shape_cast %62 : vector<1x128xf32> to vector<1x1x1x128xf32>
    %64 = vector.broadcast %63 : vector<1x1x1x128xf32> to vector<2x4x16x128xf32>
    %65 = arith.mulf %61, %64 : vector<2x4x16x128xf32>
    %c0_52 = arith.constant 0 : index
    %c0_53 = arith.constant 0 : index
    %66 = vector.load %arg6[%c0_52, %c0_53] : memref<1x128xf32, #tpu.memory_space<vmem>>, vector<1x128xf32>
    %67 = vector.shape_cast %66 : vector<1x128xf32> to vector<1x1x1x128xf32>
    %68 = vector.broadcast %67 : vector<1x1x1x128xf32> to vector<2x4x16x128xf32>
    %69 = arith.addf %65, %68 : vector<2x4x16x128xf32>
    %cst_54 = arith.constant 0.000000e+00 : f32
    %70 = vector.broadcast %cst_54 : f32 to vector<2x4x16x128xf32>
    %71 = arith.cmpf oge, %69, %70 : vector<2x4x16x128xf32>
    %c0_55 = arith.constant 0 : index
    %c0_56 = arith.constant 0 : index
    %72 = vector.load %arg7[%c0_55, %c0_56] : memref<1x128xf32, #tpu.memory_space<vmem>>, vector<1x128xf32>
    %73 = vector.shape_cast %72 : vector<1x128xf32> to vector<1x1x1x128xf32>
    %74 = vector.broadcast %73 : vector<1x1x1x128xf32> to vector<2x4x16x128xf32>
    %75 = arith.mulf %74, %69 : vector<2x4x16x128xf32>
    %76 = arith.select %71, %69, %75 : vector<2x4x16x128xi1>, vector<2x4x16x128xf32>
    %77 = arith.truncf %76 : vector<2x4x16x128xf32> to vector<2x4x16x128xbf16>
    %78 = vector.shape_cast %77 : vector<2x4x16x128xbf16> to vector<128x128xbf16>
    %c0_57 = arith.constant 0 : index
    %c0_58 = arith.constant 0 : index
    %79 = vector.load %arg8[%c0_57, %c0_58] : memref<128x128xbf16, #tpu.memory_space<vmem>>, vector<128x128xbf16>
    %cst_59 = arith.constant dense<0.000000e+00> : vector<128x128xf32>
    %80 = tpu.matmul %78, %79, %cst_59 {dimension_numbers = #tpu.dot_dimension_numbers<[1], [0], [0], [1], [0, 0, 1, 1], [], []>} : vector<128x128xbf16>, vector<128x128xbf16>, vector<128x128xf32> -> vector<128x128xf32>
    %c0_60 = arith.constant 0 : index
    %c0_61 = arith.constant 0 : index
    %81 = vector.load %arg9[%c0_60, %c0_61] : memref<1x128xf32, #tpu.memory_space<vmem>>, vector<1x128xf32>
    %82 = vector.broadcast %81 : vector<1x128xf32> to vector<128x128xf32>
    %83 = arith.mulf %80, %82 : vector<128x128xf32>
    %c0_62 = arith.constant 0 : index
    %c0_63 = arith.constant 0 : index
    %84 = vector.load %arg10[%c0_62, %c0_63] : memref<1x128xf32, #tpu.memory_space<vmem>>, vector<1x128xf32>
    %85 = vector.broadcast %84 : vector<1x128xf32> to vector<128x128xf32>
    %86 = arith.addf %83, %85 : vector<128x128xf32>
    %cst_64 = arith.constant 0.000000e+00 : f32
    %87 = vector.broadcast %cst_64 : f32 to vector<128x128xf32>
    %88 = arith.cmpf oge, %86, %87 : vector<128x128xf32>
    %c0_65 = arith.constant 0 : index
    %c0_66 = arith.constant 0 : index
    %89 = vector.load %arg11[%c0_65, %c0_66] : memref<1x128xf32, #tpu.memory_space<vmem>>, vector<1x128xf32>
    %90 = vector.broadcast %89 : vector<1x128xf32> to vector<128x128xf32>
    %91 = arith.mulf %90, %86 : vector<128x128xf32>
    %92 = arith.select %88, %86, %91 : vector<128x128xi1>, vector<128x128xf32>
    %93 = vector.shape_cast %92 : vector<128x128xf32> to vector<2x4x16x128xf32>
    %94 = arith.truncf %93 : vector<2x4x16x128xf32> to vector<2x4x16x128xbf16>
    %c0_67 = arith.constant 0 : index
    %c0_68 = arith.constant 0 : index
    %c0_69 = arith.constant 0 : index
    %c0_70 = arith.constant 0 : index
    %95 = vector.load %arg12[%c0_67, %c0_68, %c0_69, %c0_70] : memref<2x4x16x128xbf16, #tpu.memory_space<vmem>>, vector<2x4x16x128xbf16>
    tpu.vector_store %arg12[%c0_67, %c0_68, %c0_69, %c0_70], %94 {strides = array<i32>} : memref<2x4x16x128xbf16, #tpu.memory_space<vmem>>, vector<2x4x16x128xbf16>,
    return
  }
  func.func @transform_0(%arg0: i32, %arg1: i32) -> (i32, i32, i32, i32) {
    %c0_i32 = arith.constant 0 : i32
    %c0_i32_0 = arith.constant 0 : i32
    %c0_i32_1 = arith.constant 0 : i32
    return %arg0, %arg1, %c0_i32, %c0_i32_0 : i32, i32, i32, i32
  }
  func.func @transform_1(%arg0: i32, %arg1: i32) -> (i32, i32, i32, i32) {
    %c1_i32 = arith.constant 1 : i32
    %0 = arith.addi %arg1, %c1_i32 : i32
    %c2_i32 = arith.constant 2 : i32
    %1 = arith.muli %0, %c2_i32 : i32
    %c0_i32 = arith.constant 0 : i32
    %c0_i32_0 = arith.constant 0 : i32
    %c0_i32_1 = arith.constant 0 : i32
    return %arg0, %1, %c0_i32, %c0_i32_0 : i32, i32, i32, i32
  }
  func.func @transform_2(%arg0: i32, %arg1: i32) -> (i32, i32) {
    %c0_i32 = arith.constant 0 : i32
    %c0_i32_0 = arith.constant 0 : i32
    %c0_i32_1 = arith.constant 0 : i32
    return %c0_i32, %c0_i32_0 : i32, i32
  }
  func.func @transform_3(%arg0: i32, %arg1: i32) -> (i32, i32) {
    %c0_i32 = arith.constant 0 : i32
    %c0_i32_0 = arith.constant 0 : i32
    %c0_i32_1 = arith.constant 0 : i32
    return %c0_i32, %c0_i32_0 : i32, i32
  }
  func.func @transform_4(%arg0: i32, %arg1: i32) -> (i32, i32) {
    %c0_i32 = arith.constant 0 : i32
    %c0_i32_0 = arith.constant 0 : i32
    %c0_i32_1 = arith.constant 0 : i32
    return %c0_i32, %c0_i32_0 : i32, i32
  }
  func.func @transform_5(%arg0: i32, %arg1: i32) -> (i32, i32) {
    %c0_i32 = arith.constant 0 : i32
    %c0_i32_0 = arith.constant 0 : i32
    %c0_i32_1 = arith.constant 0 : i32
    return %c0_i32, %c0_i32_0 : i32, i32
  }
  func.func @transform_6(%arg0: i32, %arg1: i32) -> (i32, i32) {
    %c0_i32 = arith.constant 0 : i32
    %c0_i32_0 = arith.constant 0 : i32
    %c0_i32_1 = arith.constant 0 : i32
    return %c0_i32, %c0_i32_0 : i32, i32
  }
  func.func @transform_7(%arg0: i32, %arg1: i32) -> (i32, i32) {
    %c0_i32 = arith.constant 0 : i32
    %c0_i32_0 = arith.constant 0 : i32
    %c0_i32_1 = arith.constant 0 : i32
    return %c0_i32, %c0_i32_0 : i32, i32
  }
  func.func @transform_8(%arg0: i32, %arg1: i32) -> (i32, i32) {
    %c0_i32 = arith.constant 0 : i32
    %c0_i32_0 = arith.constant 0 : i32
    %c0_i32_1 = arith.constant 0 : i32
    return %c0_i32, %c0_i32_0 : i32, i32
  }
  func.func @transform_9(%arg0: i32, %arg1: i32) -> (i32, i32) {
    %c0_i32 = arith.constant 0 : i32
    %c0_i32_0 = arith.constant 0 : i32
    %c0_i32_1 = arith.constant 0 : i32
    return %c0_i32, %c0_i32_0 : i32, i32
  }
  func.func @transform_10(%arg0: i32, %arg1: i32) -> (i32, i32, i32, i32) {
    %c0_i32 = arith.constant 0 : i32
    %c0_i32_0 = arith.constant 0 : i32
    %c0_i32_1 = arith.constant 0 : i32
    return %arg0, %arg1, %c0_i32, %c0_i32_0 : i32, i32, i32, i32
  }
}

</mosaic_0001>

<llo_original>
// kernel: tpu_custom_call.1
$region0: #{tpu_custom_call.1}
  #allocation0 [shape = 'u32[]', space=smem, size = 0x4, offset = 0x4, fixed_abs, tag = 'smem constant byte address 0x4 - core index']
  #allocation1 [shape = 'u32[144,128]{1,0:T(1,128)}', space=vmem, size = 0x12000, scoped, tag = 'internal scratch']
  #allocation2 [shape = 'f32[2,6,18,128]{3,2,1,0:T(8,128)}', space=vmem, size = 0x24000, scoped, tag = 'scratch operand']
  #allocation21 [shape = 's32[]', space=sflag, size = 0x4, offset = 0, fixed_abs, tag = 'sflag constant byte address 0x0 - dummy sync flag']
  #allocation23 [shape = 's32[]', space=sflag, size = 0x4, offset = 0, fixed_abs, tag = 'sflag constant byte address 0x0 - dummy sync flag']
  #allocation25 [shape = 's32[]', space=sflag, size = 0x4, offset = 0, fixed_abs, tag = 'sflag constant byte address 0x0 - dummy sync flag']
  %s0 = inlined_call_operand.hbm [shape: bf16[2,18,18,128], index: 0, kind: input, shape index: {}]
  %s1 = inlined_call_operand.hbm [shape: bf16[2,18,18,128], index: 1, kind: input, shape index: {}]
  %s2 = inlined_call_operand.hbm [shape: f32[9,128], index: 2, kind: input, shape index: {}]
  %s3 = inlined_call_operand.hbm [shape: f32[1,128], index: 3, kind: input, shape index: {}]
  %s4 = inlined_call_operand.hbm [shape: f32[1,128], index: 4, kind: input, shape index: {}]
  %s5 = inlined_call_operand.hbm [shape: f32[1,128], index: 5, kind: input, shape index: {}]
  %s6 = inlined_call_operand.hbm [shape: bf16[128,128], index: 6, kind: input, shape index: {}]
  %s7 = inlined_call_operand.hbm [shape: f32[1,128], index: 7, kind: input, shape index: {}]
  %s8 = inlined_call_operand.hbm [shape: f32[1,128], index: 8, kind: input, shape index: {}]
  %s9 = inlined_call_operand.hbm [shape: f32[1,128], index: 9, kind: input, shape index: {}]
  %s10 = inlined_call_operand.hbm [shape: bf16[2,16,16,128], index: 10, kind: output, shape index: {}]
  %s11 = sld [smem:[#allocation0]]
  $region113: #{tpu_custom_call.1} parent=0
    _
  %s13 = ssub.s32 1, %s11
  %s14 = scalar_select 0, %s13, %s11
  $region1: #{tpu_custom_call.1} parent=0
    #allocation3 [shape = 'u8[98304]{0}', space=vmem, size = 0x18000, scoped, tag = 'input window, operand 0']
    #allocation4 [shape = 's32[2]{0}', space=sflag, size = 0x8, scoped, tag = 'scoped memory for tpu_custom_call.1']
    #allocation5 [shape = 's32[2]{0}', space=sflag, size = 0x8, scoped, tag = 'scoped memory for tpu_custom_call.1']
    #allocation6 [shape = 'u8[49152]{0}', space=vmem, size = 0xc000, scoped, tag = 'input window, operand 1']
    #allocation7 [shape = 's32[2]{0}', space=sflag, size = 0x8, scoped, tag = 'scoped memory for tpu_custom_call.1']
    #allocation8 [shape = 'u8[8192]{0}', space=vmem, size = 0x2000, scoped, tag = 'input window, operand 2, single buffered']
    #allocation9 [shape = 'u8[512]{0}', space=vmem, size = 0x400, scoped, tag = 'input window, operand 3, single buffered']
    #allocation10 [shape = 's32[1]{0}', space=sflag, size = 0x4, scoped, tag = 'scoped memory for tpu_custom_call.1']
    #allocation11 [shape = 'u8[512]{0}', space=vmem, size = 0x400, scoped, tag = 'input window, operand 4, single buffered']
    #allocation12 [shape = 'u8[512]{0}', space=vmem, size = 0x400, scoped, tag = 'input window, operand 5, single buffered']
    #allocation13 [shape = 's32[1]{0}', space=sflag, size = 0x4, scoped, tag = 'scoped memory for tpu_custom_call.1']
    #allocation14 [shape = 'u8[32768]{0}', space=vmem, size = 0x8000, scoped, tag = 'input window, operand 6, single buffered']
    #allocation15 [shape = 'u8[512]{0}', space=vmem, size = 0x400, scoped, tag = 'input window, operand 7, single buffered']
    #allocation16 [shape = 's32[1]{0}', space=sflag, size = 0x4, scoped, tag = 'scoped memory for tpu_custom_call.1']
    #allocation17 [shape = 'u8[512]{0}', space=vmem, size = 0x400, scoped, tag = 'input window, operand 8, single buffered']
    #allocation18 [shape = 'u8[512]{0}', space=vmem, size = 0x400, scoped, tag = 'input window, operand 9, single buffered']
    #allocation19 [shape = 's32[1]{0}', space=sflag, size = 0x4, scoped, tag = 'scoped memory for tpu_custom_call.1']
    #allocation20 [shape = 'u8[65536]{0}', space=vmem, size = 0x10000, scoped, tag = 'output window, operand 0']
    %15 = vsyncpa [#allocation4], 0
    %s16 = scalar_lea.sflag [#allocation4], 1
    %17 = vsyncpa %s16, 0
    %18 = vsyncpa [#allocation7], 0
    %s19 = scalar_lea.sflag [#allocation7], 1
    %20 = vsyncpa %s19, 0
    %21 = vsyncpa [#allocation10], 0
    %22 = vsyncpa [#allocation13], 0
    %23 = vsyncpa [#allocation16], 0
    %24 = vsyncpa [#allocation19], 0
    %25 = vsyncpa [#allocation5], 0
    %s26 = scalar_lea.sflag [#allocation5], 1
    %27 = vsyncpa %s26, 0
    loop: start=0, step=1, limit=6
    $region2: #{tpu_custom_call.1} parent=1 // loop_pre_header
      _
    $region3: #{tpu_custom_call.1} parent=1 // loop_header
      %s29 = sphi 0, %s33
      %p30 = scmp.ge.s32.totalorder %s29, 6
      %s36 = sphi 0, %s48
      %s37 = sphi 0, %s44
      %s38 = sphi 0, %s36
      %s39 = sphi 0, %s37
      %s40 = sphi 0, %s38
      %s41 = sphi 0, %s39
      %s53 = sphi 0, %s55
      %s56 = sphi 0, %s53
      %s57 = sphi 0, %s56
      %s73 = sphi 0, %s57
      %s85 = sphi 0, %s87
      %s88 = sphi 0, %s85
      %s89 = sphi 0, %s88
      %s105 = sphi 0, %s89
      %s109 = sphi 0, %s109
      %s111 = sphi 0, %s109
      %s112 = sphi 0, %s111
      %s126 = sphi 0, %s112
      %s130 = sphi 0, %s130
      %s132 = sphi 0, %s130
      %s133 = sphi 0, %s132
      %s147 = sphi 0, %s133
      %s151 = sphi 0, %s151
      %s153 = sphi 0, %s151
      %s154 = sphi 0, %s153
      %s168 = sphi 0, %s154
      %s172 = sphi 0, %s172
      %s174 = sphi 0, %s172
      %s175 = sphi 0, %s174
      %s189 = sphi 0, %s175
      %s193 = sphi 0, %s193
      %s195 = sphi 0, %s193
      %s196 = sphi 0, %s195
      %s210 = sphi 0, %s196
      %s214 = sphi 0, %s214
      %s216 = sphi 0, %s214
      %s217 = sphi 0, %s216
      %s231 = sphi 0, %s217
      %s235 = sphi 0, %s235
      %s237 = sphi 0, %s235
      %s238 = sphi 0, %s237
      %s252 = sphi 0, %s238
      %s256 = sphi 0, %s256
      %s258 = sphi 0, %s256
      %s259 = sphi 0, %s258
      %s273 = sphi 0, %s259
      %s281 = sphi 0, %s283
      %s284 = sphi 0, %s281
      %s285 = sphi 0, %s284
      %s301 = sphi 0, %s285
    $region4: #{tpu_custom_call.1} parent=1 // loop_header_branch
      %32 = sbr.rel (%p30) target = $region8
    $region5: #{tpu_custom_call.1} parent=1 // loop_body
      %s34 = ssub.s32 %s29, 1
      %s35 = ssub.s32 %s29, 2
      %s42 = sadd.s32 1, %s37
      %p43 = scmp.ge.s32.totalorder %s42, 4
      %s44 = scalar_select %p43, 0, %s42
      %s45 = sadd.s32 1, %s36
      %s46 = scalar_select %p43, %s45, %s36
      %p47 = scmp.ge.s32.totalorder %s46, 1
      %s48 = scalar_select %p47, 0, %s46
      %s49 = ssub.s32 %s36, %s48
      %s50 = ssub.s32 %s37, %s44
      %s51 = sor.u32 %s49, %s50
      %p52 = scmp.eq.s32.totalorder %s51, 0
      %s54 = sadd.s32 %s53, 1
      %s55 = scalar_select %p52, %s53, %s54
      %p58 = pneg %p52
      %p59 = scmp.eq.s32.totalorder %s29, 3
      %p60 = por %p58, %p59
      %p61 = scmp.ne.s32.totalorder %s53, %s56
      %p62 = scmp.eq.s32.totalorder %s29, 0
      %p63 = por %p61, %p62
      %p64 = scmp.ne.s32.totalorder %s53, %s56
      %p65 = scmp.eq.s32.totalorder %s34, 3
      %p66 = por %p64, %p65
      %p67 = scmp.ne.s32.totalorder %s56, %s57
      %p68 = scmp.eq.s32.totalorder %s34, 0
      %p69 = por %p67, %p68
      %p70 = scmp.ne.s32.totalorder %s56, %s57
      %p71 = scmp.eq.s32.totalorder %s35, 3
      %p72 = por %p70, %p71
      %p74 = scmp.ne.s32.totalorder %s57, %s73
      %p75 = scmp.eq.s32.totalorder %s35, 0
      %p76 = por %p74, %p75
      %s77 = sadd.s32 %s37, 1
      %s78 = smul.u32 %s77, 2
      %s79 = sadd.s32 %s44, 1
      %s80 = smul.u32 %s79, 2
      %s81 = ssub.s32 %s36, %s48
      %s82 = ssub.s32 %s78, %s80
      %s83 = sor.u32 %s81, %s82
      %p84 = scmp.eq.s32.totalorder %s83, 0
      %s86 = sadd.s32 %s85, 1
      %s87 = scalar_select %p84, %s85, %s86
      %p90 = pneg %p84
      %p91 = scmp.eq.s32.totalorder %s29, 3
      %p92 = por %p90, %p91
      %p93 = scmp.ne.s32.totalorder %s85, %s88
      %p94 = scmp.eq.s32.totalorder %s29, 0
      %p95 = por %p93, %p94
      %p96 = scmp.ne.s32.totalorder %s85, %s88
      %p97 = scmp.eq.s32.totalorder %s34, 3
      %p98 = por %p96, %p97
      %p99 = scmp.ne.s32.totalorder %s88, %s89
      %p100 = scmp.eq.s32.totalorder %s34, 0
      %p101 = por %p99, %p100
      %p102 = scmp.ne.s32.totalorder %s88, %s89
      %p103 = scmp.eq.s32.totalorder %s35, 3
      %p104 = por %p102, %p103
      %p106 = scmp.ne.s32.totalorder %s89, %s105
      %p107 = scmp.eq.s32.totalorder %s35, 0
      %p108 = por %p106, %p107
      %s110 = sadd.s32 %s109, 1
      %p113 = scmp.eq.s32.totalorder %s29, 3
      %p114 = scmp.ne.s32.totalorder %s109, %s111
      %p115 = scmp.eq.s32.totalorder %s29, 0
      %p116 = por %p114, %p115
      %p117 = scmp.ne.s32.totalorder %s109, %s111
      %p118 = scmp.eq.s32.totalorder %s34, 3
      %p119 = por %p117, %p118
      %p120 = scmp.ne.s32.totalorder %s111, %s112
      %p121 = scmp.eq.s32.totalorder %s34, 0
      %p122 = por %p120, %p121
      %p123 = scmp.ne.s32.totalorder %s111, %s112
      %p124 = scmp.eq.s32.totalorder %s35, 3
      %p125 = por %p123, %p124
      %p127 = scmp.ne.s32.totalorder %s112, %s126
      %p128 = scmp.eq.s32.totalorder %s35, 0
      %p129 = por %p127, %p128
      %s131 = sadd.s32 %s130, 1
      %p134 = scmp.eq.s32.totalorder %s29, 3
      %p135 = scmp.ne.s32.totalorder %s130, %s132
      %p136 = scmp.eq.s32.totalorder %s29, 0
      %p137 = por %p135, %p136
      %p138 = scmp.ne.s32.totalorder %s130, %s132
      %p139 = scmp.eq.s32.totalorder %s34, 3
      %p140 = por %p138, %p139
      %p141 = scmp.ne.s32.totalorder %s132, %s133
      %p142 = scmp.eq.s32.totalorder %s34, 0
      %p143 = por %p141, %p142
      %p144 = scmp.ne.s32.totalorder %s132, %s133
      %p145 = scmp.eq.s32.totalorder %s35, 3
      %p146 = por %p144, %p145
      %p148 = scmp.ne.s32.totalorder %s133, %s147
      %p149 = scmp.eq.s32.totalorder %s35, 0
      %p150 = por %p148, %p149
      %s152 = sadd.s32 %s151, 1
      %p155 = scmp.eq.s32.totalorder %s29, 3
      %p156 = scmp.ne.s32.totalorder %s151, %s153
      %p157 = scmp.eq.s32.totalorder %s29, 0
      %p158 = por %p156, %p157
      %p159 = scmp.ne.s32.totalorder %s151, %s153
      %p160 = scmp.eq.s32.totalorder %s34, 3
      %p161 = por %p159, %p160
      %p162 = scmp.ne.s32.totalorder %s153, %s154
      %p163 = scmp.eq.s32.totalorder %s34, 0
      %p164 = por %p162, %p163
      %p165 = scmp.ne.s32.totalorder %s153, %s154
      %p166 = scmp.eq.s32.totalorder %s35, 3
      %p167 = por %p165, %p166
      %p169 = scmp.ne.s32.totalorder %s154, %s168
      %p170 = scmp.eq.s32.totalorder %s35, 0
      %p171 = por %p169, %p170
      %s173 = sadd.s32 %s172, 1
      %p176 = scmp.eq.s32.totalorder %s29, 3
      %p177 = scmp.ne.s32.totalorder %s172, %s174
      %p178 = scmp.eq.s32.totalorder %s29, 0
      %p179 = por %p177, %p178
      %p180 = scmp.ne.s32.totalorder %s172, %s174
      %p181 = scmp.eq.s32.totalorder %s34, 3
      %p182 = por %p180, %p181
      %p183 = scmp.ne.s32.totalorder %s174, %s175
      %p184 = scmp.eq.s32.totalorder %s34, 0
      %p185 = por %p183, %p184
      %p186 = scmp.ne.s32.totalorder %s174, %s175
      %p187 = scmp.eq.s32.totalorder %s35, 3
      %p188 = por %p186, %p187
      %p190 = scmp.ne.s32.totalorder %s175, %s189
      %p191 = scmp.eq.s32.totalorder %s35, 0
      %p192 = por %p190, %p191
      %s194 = sadd.s32 %s193, 1
      %p197 = scmp.eq.s32.totalorder %s29, 3
      %p198 = scmp.ne.s32.totalorder %s193, %s195
      %p199 = scmp.eq.s32.totalorder %s29, 0
      %p200 = por %p198, %p199
      %p201 = scmp.ne.s32.totalorder %s193, %s195
      %p202 = scmp.eq.s32.totalorder %s34, 3
      %p203 = por %p201, %p202
      %p204 = scmp.ne.s32.totalorder %s195, %s196
      %p205 = scmp.eq.s32.totalorder %s34, 0
      %p206 = por %p204, %p205
      %p207 = scmp.ne.s32.totalorder %s195, %s196
      %p208 = scmp.eq.s32.totalorder %s35, 3
      %p209 = por %p207, %p208
      %p211 = scmp.ne.s32.totalorder %s196, %s210
      %p212 = scmp.eq.s32.totalorder %s35, 0
      %p213 = por %p211, %p212
      %s215 = sadd.s32 %s214, 1
      %p218 = scmp.eq.s32.totalorder %s29, 3
      %p219 = scmp.ne.s32.totalorder %s214, %s216
      %p220 = scmp.eq.s32.totalorder %s29, 0
      %p221 = por %p219, %p220
      %p222 = scmp.ne.s32.totalorder %s214, %s216
      %p223 = scmp.eq.s32.totalorder %s34, 3
      %p224 = por %p222, %p223
      %p225 = scmp.ne.s32.totalorder %s216, %s217
      %p226 = scmp.eq.s32.totalorder %s34, 0
      %p227 = por %p225, %p226
      %p228 = scmp.ne.s32.totalorder %s216, %s217
      %p229 = scmp.eq.s32.totalorder %s35, 3
      %p230 = por %p228, %p229
      %p232 = scmp.ne.s32.totalorder %s217, %s231
      %p233 = scmp.eq.s32.totalorder %s35, 0
      %p234 = por %p232, %p233
      %s236 = sadd.s32 %s235, 1
      %p239 = scmp.eq.s32.totalorder %s29, 3
      %p240 = scmp.ne.s32.totalorder %s235, %s237
      %p241 = scmp.eq.s32.totalorder %s29, 0
      %p242 = por %p240, %p241
      %p243 = scmp.ne.s32.totalorder %s235, %s237
      %p244 = scmp.eq.s32.totalorder %s34, 3
      %p245 = por %p243, %p244
      %p246 = scmp.ne.s32.totalorder %s237, %s238
      %p247 = scmp.eq.s32.totalorder %s34, 0
      %p248 = por %p246, %p247
      %p249 = scmp.ne.s32.totalorder %s237, %s238
      %p250 = scmp.eq.s32.totalorder %s35, 3
      %p251 = por %p249, %p250
      %p253 = scmp.ne.s32.totalorder %s238, %s252
      %p254 = scmp.eq.s32.totalorder %s35, 0
      %p255 = por %p253, %p254
      %s257 = sadd.s32 %s256, 1
      %p260 = scmp.eq.s32.totalorder %s29, 3
      %p261 = scmp.ne.s32.totalorder %s256, %s258
      %p262 = scmp.eq.s32.totalorder %s29, 0
      %p263 = por %p261, %p262
      %p264 = scmp.ne.s32.totalorder %s256, %s258
      %p265 = scmp.eq.s32.totalorder %s34, 3
      %p266 = por %p264, %p265
      %p267 = scmp.ne.s32.totalorder %s258, %s259
      %p268 = scmp.eq.s32.totalorder %s34, 0
      %p269 = por %p267, %p268
      %p270 = scmp.ne.s32.totalorder %s258, %s259
      %p271 = scmp.eq.s32.totalorder %s35, 3
      %p272 = por %p270, %p271
      %p274 = scmp.ne.s32.totalorder %s259, %s273
      %p275 = scmp.eq.s32.totalorder %s35, 0
      %p276 = por %p274, %p275
      %s277 = ssub.s32 %s36, %s48
      %s278 = ssub.s32 %s37, %s44
      %s279 = sor.u32 %s277, %s278
      %p280 = scmp.eq.s32.totalorder %s279, 0
      %s282 = sadd.s32 %s281, 1
      %s283 = scalar_select %p280, %s281, %s282
      %p286 = pneg %p280
      %p287 = scmp.eq.s32.totalorder %s29, 3
      %p288 = por %p286, %p287
      %p289 = scmp.ne.s32.totalorder %s281, %s284
      %p290 = scmp.eq.s32.totalorder %s29, 0
      %p291 = por %p289, %p290
      %p292 = scmp.ne.s32.totalorder %s281, %s284
      %p293 = scmp.eq.s32.totalorder %s34, 3
      %p294 = por %p292, %p293
      %p295 = scmp.ne.s32.totalorder %s284, %s285
      %p296 = scmp.eq.s32.totalorder %s34, 0
      %p297 = por %p295, %p296
      %p298 = scmp.ne.s32.totalorder %s284, %s285
      %p299 = scmp.eq.s32.totalorder %s35, 3
      %p300 = por %p298, %p299
      %p302 = scmp.ne.s32.totalorder %s285, %s301
      %p303 = scmp.eq.s32.totalorder %s35, 0
      %p304 = por %p302, %p303
      %p305 = scmp.le.s32.totalorder 1, %s29
      %p306 = scmp.lt.s32.totalorder %s29, 5
      %p307 = pnand %p305, %p306
      %p308 = pneg %p307
      // Predicated region
      $region9: #{tpu_custom_call.1} parent=5 // pred_check
        _
      $region10: #{tpu_custom_call.1} parent=5 // pred_check_branch
        %310 = sbr.rel (%p307) target = $region12
      $region11: #{tpu_custom_call.1} parent=5 // pred_region
        %s311 = ssub.s32 %s29, 1
        // Predicated region
        $region13: #{tpu_custom_call.1} parent=11 // pred_check
          %p312 = pneg %p122
        $region14: #{tpu_custom_call.1} parent=11 // pred_check_branch
          %314 = sbr.rel (%p312) target = $region16
        $region15: #{tpu_custom_call.1} parent=11 // pred_region
          %s316 = ssub.s32 256, 256
          %317 = vsyncadd [#allocation7], %s316
          %s318 = sshll.u32 [#allocation8], 4
          %s319 = int_to_ptr.vmem [resolvable:$true] %s318
          %324 = dma.hbm_to_vmem [thread:$0]  %s2, 256, %s319, [#allocation7], 128, 128, 8
        $region16: #{tpu_custom_call.1} parent=11 // pred_fallthru
          _
        // Predicated region
        $region17: #{tpu_custom_call.1} parent=11 // pred_check
          %p325 = pneg %p143
        $region18: #{tpu_custom_call.1} parent=11 // pred_check_branch
          %327 = sbr.rel (%p325) target = $region20
        $region19: #{tpu_custom_call.1} parent=11 // pred_region
          %s329 = ssub.s32 16, 16
          %330 = vsyncadd [#allocation10], %s329
          %s332 = sshll.u32 [#allocation9], 4
          %s333 = int_to_ptr.vmem [resolvable:$true] %s332
          %335 = dma.hbm_to_vmem [thread:$0]  %s3, 16, %s333, [#allocation10]
        $region20: #{tpu_custom_call.1} parent=11 // pred_fallthru
          _
        // Predicated region
        $region21: #{tpu_custom_call.1} parent=11 // pred_check
          %p336 = pneg %p164
        $region22: #{tpu_custom_call.1} parent=11 // pred_check_branch
          %338 = sbr.rel (%p336) target = $region24
        $region23: #{tpu_custom_call.1} parent=11 // pred_region
          %s340 = ssub.s32 16, 16
          %341 = vsyncadd [#allocation10], %s340
          %s343 = sshll.u32 [#allocation11], 4
          %s344 = int_to_ptr.vmem [resolvable:$true] %s343
          %346 = dma.hbm_to_vmem [thread:$0]  %s4, 16, %s344, [#allocation10]
        $region24: #{tpu_custom_call.1} parent=11 // pred_fallthru
          _
        // Predicated region
        $region25: #{tpu_custom_call.1} parent=11 // pred_check
          %p347 = pneg %p185
        $region26: #{tpu_custom_call.1} parent=11 // pred_check_branch
          %349 = sbr.rel (%p347) target = $region28
        $region27: #{tpu_custom_call.1} parent=11 // pred_region
          %s351 = ssub.s32 16, 16
          %352 = vsyncadd [#allocation13], %s351
          %s354 = sshll.u32 [#allocation12], 4
          %s355 = int_to_ptr.vmem [resolvable:$true] %s354
          %357 = dma.hbm_to_vmem [thread:$0]  %s5, 16, %s355, [#allocation13]
        $region28: #{tpu_custom_call.1} parent=11 // pred_fallthru
          _
        // Predicated region
        $region29: #{tpu_custom_call.1} parent=11 // pred_check
          %p358 = pneg %p206
        $region30: #{tpu_custom_call.1} parent=11 // pred_check_branch
          %360 = sbr.rel (%p358) target = $region32
        $region31: #{tpu_custom_call.1} parent=11 // pred_region
          %s362 = ssub.s32 1024, 1024
          %363 = vsyncadd [#allocation13], %s362
          %s364 = sshll.u32 [#allocation14], 4
          %s365 = int_to_ptr.vmem [resolvable:$true] %s364
          %370 = dma.hbm_to_vmem [thread:$0]  %s6, 1024, %s365, [#allocation13], 64, 64, 4
        $region32: #{tpu_custom_call.1} parent=11 // pred_fallthru
          _
        // Predicated region
        $region33: #{tpu_custom_call.1} parent=11 // pred_check
          %p371 = pneg %p227
        $region34: #{tpu_custom_call.1} parent=11 // pred_check_branch
          %373 = sbr.rel (%p371) target = $region36
        $region35: #{tpu_custom_call.1} parent=11 // pred_region
          %s375 = ssub.s32 16, 16
          %376 = vsyncadd [#allocation16], %s375
          %s378 = sshll.u32 [#allocation15], 4
          %s379 = int_to_ptr.vmem [resolvable:$true] %s378
          %381 = dma.hbm_to_vmem [thread:$0]  %s7, 16, %s379, [#allocation16]
        $region36: #{tpu_custom_call.1} parent=11 // pred_fallthru
          _
        // Predicated region
        $region37: #{tpu_custom_call.1} parent=11 // pred_check
          %p382 = pneg %p248
        $region38: #{tpu_custom_call.1} parent=11 // pred_check_branch
          %384 = sbr.rel (%p382) target = $region40
        $region39: #{tpu_custom_call.1} parent=11 // pred_region
          %s386 = ssub.s32 16, 16
          %387 = vsyncadd [#allocation16], %s386
          %s389 = sshll.u32 [#allocation17], 4
          %s390 = int_to_ptr.vmem [resolvable:$true] %s389
          %392 = dma.hbm_to_vmem [thread:$0]  %s8, 16, %s390, [#allocation16]
        $region40: #{tpu_custom_call.1} parent=11 // pred_fallthru
          _
        // Predicated region
        $region41: #{tpu_custom_call.1} parent=11 // pred_check
          %p393 = pneg %p269
        $region42: #{tpu_custom_call.1} parent=11 // pred_check_branch
          %395 = sbr.rel (%p393) target = $region44
        $region43: #{tpu_custom_call.1} parent=11 // pred_region
          %s397 = ssub.s32 16, 16
          %398 = vsyncadd [#allocation19], %s397
          %s400 = sshll.u32 [#allocation18], 4
          %s401 = int_to_ptr.vmem [resolvable:$true] %s400
          %403 = dma.hbm_to_vmem [thread:$0]  %s9, 16, %s401, [#allocation19]
        $region44: #{tpu_custom_call.1} parent=11 // pred_fallthru
          _
      $region12: #{tpu_custom_call.1} parent=5 // pred_fallthru
        _
      %p404 = scmp.lt.s32.totalorder %s29, 4
      // Predicated region
      $region45: #{tpu_custom_call.1} parent=5 // pred_check
        %p405 = pneg %p404
      $region46: #{tpu_custom_call.1} parent=5 // pred_check_branch
        %407 = sbr.rel (%p405) target = $region48
      $region47: #{tpu_custom_call.1} parent=5 // pred_region
        // Predicated region
        $region49: #{tpu_custom_call.1} parent=47 // pred_check
          %p408 = pneg %p63
        $region50: #{tpu_custom_call.1} parent=47 // pred_check_branch
          %410 = sbr.rel (%p408) target = $region52
        $region51: #{tpu_custom_call.1} parent=47 // pred_region
          #allocation22 [shape = 'u32[6]{0}', space=smem, size = 0x18, scoped, tag = 'DMA stride descriptor']
          %s411 = sand.u32 %s53, 1
          %s412 = scalar_lea.sflag [#allocation4], %s411
          %s413 = sand.u32 %s53, 1
          %s414 = smul.addr %s413, 96
          %s415 = scalar_lea.vmem [#allocation3], %s414
          %s416 = smul.u32 2, %s36
          %s417 = smul.u32 4, %s37
          %s418 = ssub.s32 18, %s417
          %p419 = scmp.lt.s32.totalorder %s418, 4
          %s420 = scalar_select %p419, %s418, 4
          %s421 = smul.u32 128, %s420
          %s422 = smul.u32 %s421, 3
          %s424 = ssub.s32 1536, %s422
          %425 = vsyncadd %s412, %s424
          %p426 = scmp.ne.s32.totalorder 0, %s422
          %s427 = smul.addr %s417, 3
          %s428 = smul.addr %s416, 54
          %s429 = sadd.s32 %s427, %s428
          %s430 = smul.addr %s429, 64
          %s431 = scalar_lea.hbm %s0, %s430
          %s432 = smul.u32 %s420, 3
          %s433 = smul.u32 4, %s432
          %s434 = smul.u32 %s433, 2
          %s436 = sshll.u32 1, 14
          %s437 = sxor.u32 4294967295, %s436
          %s439 = sld [smem:[#allocation0]]
          %s440 = sadd.s32 2, %s439
          %s442 = sshll.u32 7, 26
          %s443 = sxor.u32 4294967295, %s442
          %s444 = sand.u32 0, %s443
          %s445 = sshll.u32 %s440, 26
          %s446 = sor.u32 %s444, %s445
          %s447 = sshll.u32 %s415, 4
          %s448 = int_to_ptr.vmem [resolvable:$true] %s447
          %s449 = sshll.u32 %s434, 4
          %454 = sst [smem:[#allocation22]] 3456
          %s455 = scalar_lea.smem [#allocation22], 1
          %456 = sst [smem:[%s455]] 768
          %s457 = scalar_lea.smem [#allocation22], 2
          %458 = sst [smem:[%s457]] %s432
          %s459 = scalar_lea.smem [#allocation22], 3
          %460 = sst [smem:[%s459]] 64
          %s461 = scalar_lea.smem [#allocation22], 4
          %462 = sst [smem:[%s461]] 64
          %s463 = scalar_lea.smem [#allocation22], 5
          %464 = sst [smem:[%s463]] 4
          %466 = dma.general (%p426), %s431, %s449, %s448, %s412, [#allocation21], [#allocation22], %s446, 0
        $region52: #{tpu_custom_call.1} parent=47 // pred_fallthru
          _
        // Predicated region
        $region53: #{tpu_custom_call.1} parent=47 // pred_check
          %p467 = pneg %p95
        $region54: #{tpu_custom_call.1} parent=47 // pred_check_branch
          %469 = sbr.rel (%p467) target = $region56
        $region55: #{tpu_custom_call.1} parent=47 // pred_region
          #allocation24 [shape = 'u32[6]{0}', space=smem, size = 0x18, scoped, tag = 'DMA stride descriptor']
          %s470 = sand.u32 %s29, 1
          %s471 = scalar_lea.sflag [#allocation7], %s470
          %s472 = sand.u32 %s85, 1
          %s473 = smul.addr %s472, 48
          %s474 = scalar_lea.vmem [#allocation6], %s473
          %s475 = sadd.s32 %s37, 1
          %s476 = smul.u32 %s475, 2
          %s477 = smul.u32 2, %s36
          %s478 = smul.u32 2, %s476
          %s480 = ssub.s32 768, 768
          %481 = vsyncadd %s471, %s480
          %s482 = smul.addr %s478, 3
          %s483 = smul.addr %s477, 54
          %s484 = sadd.s32 %s482, %s483
          %s485 = smul.addr %s484, 64
          %s486 = scalar_lea.hbm %s1, %s485
          %s488 = sshll.u32 1, 14
          %s489 = sxor.u32 4294967295, %s488
          %s491 = sld [smem:[#allocation0]]
          %s492 = sadd.s32 2, %s491
          %s494 = sshll.u32 7, 26
          %s495 = sxor.u32 4294967295, %s494
          %s496 = sand.u32 0, %s495
          %s497 = sshll.u32 %s492, 26
          %s498 = sor.u32 %s496, %s497
          %s499 = sshll.u32 %s474, 4
          %s500 = int_to_ptr.vmem [resolvable:$true] %s499
          %506 = sst [smem:[#allocation24]] 3456
          %s507 = scalar_lea.smem [#allocation24], 1
          %508 = sst [smem:[%s507]] 384
          %s509 = scalar_lea.smem [#allocation24], 2
          %510 = sst [smem:[%s509]] 6
          %s511 = scalar_lea.smem [#allocation24], 3
          %512 = sst [smem:[%s511]] 64
          %s513 = scalar_lea.smem [#allocation24], 4
          %514 = sst [smem:[%s513]] 64
          %s515 = scalar_lea.smem [#allocation24], 5
          %516 = sst [smem:[%s515]] 4
          %518 = dma.general %s486, 768, %s500, %s471, [#allocation23], [#allocation24], %s498, 0
        $region56: #{tpu_custom_call.1} parent=47 // pred_fallthru
          _
      $region48: #{tpu_custom_call.1} parent=5 // pred_fallthru
        _
      %p519 = scmp.le.s32.totalorder 1, %s29
      %p520 = scmp.lt.s32.totalorder %s29, 5
      %p521 = pnand %p519, %p520
      %p522 = pneg %p521
      // Predicated region
      $region57: #{tpu_custom_call.1} parent=5 // pred_check
        _
      $region58: #{tpu_custom_call.1} parent=5 // pred_check_branch
        %524 = sbr.rel (%p521) target = $region60
      $region59: #{tpu_custom_call.1} parent=5 // pred_region
        %s525 = ssub.s32 %s29, 1
        %s526 = sand.u32 %s56, 1
        %s527 = scalar_lea.sflag [#allocation4], %s526
        %s528 = sand.u32 %s56, 1
        %s529 = smul.addr %s528, 96
        %s530 = scalar_lea.vmem [#allocation3], %s529
        // Predicated region
        $region61: #{tpu_custom_call.1} parent=59 // pred_check
          %p531 = pneg %p69
        $region62: #{tpu_custom_call.1} parent=59 // pred_check_branch
          %533 = sbr.rel (%p531) target = $region64
        $region63: #{tpu_custom_call.1} parent=59 // pred_region
          %534 = dma.done %s527, 1536
        $region64: #{tpu_custom_call.1} parent=59 // pred_fallthru
          _
        %s535 = sand.u32 %s34, 1
        %s536 = scalar_lea.sflag [#allocation7], %s535
        %s537 = sand.u32 %s88, 1
        %s538 = smul.addr %s537, 48
        %s539 = scalar_lea.vmem [#allocation6], %s538
        // Predicated region
        $region65: #{tpu_custom_call.1} parent=59 // pred_check
          %p540 = pneg %p101
        $region66: #{tpu_custom_call.1} parent=59 // pred_check_branch
          %542 = sbr.rel (%p540) target = $region68
        $region67: #{tpu_custom_call.1} parent=59 // pred_region
          %543 = dma.done %s536, 768
        $region68: #{tpu_custom_call.1} parent=59 // pred_fallthru
          _
        // Predicated region
        $region69: #{tpu_custom_call.1} parent=59 // pred_check
          %p544 = pneg %p122
        $region70: #{tpu_custom_call.1} parent=59 // pred_check_branch
          %546 = sbr.rel (%p544) target = $region72
        $region71: #{tpu_custom_call.1} parent=59 // pred_region
          %547 = dma.done [#allocation7], 256
        $region72: #{tpu_custom_call.1} parent=59 // pred_fallthru
          _
        // Predicated region
        $region73: #{tpu_custom_call.1} parent=59 // pred_check
          %p548 = pneg %p143
        $region74: #{tpu_custom_call.1} parent=59 // pred_check_branch
          %550 = sbr.rel (%p548) target = $region76
        $region75: #{tpu_custom_call.1} parent=59 // pred_region
          %551 = dma.done [#allocation10], 16
        $region76: #{tpu_custom_call.1} parent=59 // pred_fallthru
          _
        // Predicated region
        $region77: #{tpu_custom_call.1} parent=59 // pred_check
          %p552 = pneg %p164
        $region78: #{tpu_custom_call.1} parent=59 // pred_check_branch
          %554 = sbr.rel (%p552) target = $region80
        $region79: #{tpu_custom_call.1} parent=59 // pred_region
          %555 = dma.done [#allocation10], 16
        $region80: #{tpu_custom_call.1} parent=59 // pred_fallthru
          _
        // Predicated region
        $region81: #{tpu_custom_call.1} parent=59 // pred_check
          %p556 = pneg %p185
        $region82: #{tpu_custom_call.1} parent=59 // pred_check_branch
          %558 = sbr.rel (%p556) target = $region84
        $region83: #{tpu_custom_call.1} parent=59 // pred_region
          %559 = dma.done [#allocation13], 16
        $region84: #{tpu_custom_call.1} parent=59 // pred_fallthru
          _
        // Predicated region
        $region85: #{tpu_custom_call.1} parent=59 // pred_check
          %p560 = pneg %p206
        $region86: #{tpu_custom_call.1} parent=59 // pred_check_branch
          %562 = sbr.rel (%p560) target = $region88
        $region87: #{tpu_custom_call.1} parent=59 // pred_region
          %563 = dma.done [#allocation13], 1024
        $region88: #{tpu_custom_call.1} parent=59 // pred_fallthru
          _
        // Predicated region
        $region89: #{tpu_custom_call.1} parent=59 // pred_check
          %p564 = pneg %p227
        $region90: #{tpu_custom_call.1} parent=59 // pred_check_branch
          %566 = sbr.rel (%p564) target = $region92
        $region91: #{tpu_custom_call.1} parent=59 // pred_region
          %567 = dma.done [#allocation16], 16
        $region92: #{tpu_custom_call.1} parent=59 // pred_fallthru
          _
        // Predicated region
        $region93: #{tpu_custom_call.1} parent=59 // pred_check
          %p568 = pneg %p248
        $region94: #{tpu_custom_call.1} parent=59 // pred_check_branch
          %570 = sbr.rel (%p568) target = $region96
        $region95: #{tpu_custom_call.1} parent=59 // pred_region
          %571 = dma.done [#allocation16], 16
        $region96: #{tpu_custom_call.1} parent=59 // pred_fallthru
          _
        // Predicated region
        $region97: #{tpu_custom_call.1} parent=59 // pred_check
          %p572 = pneg %p269
        $region98: #{tpu_custom_call.1} parent=59 // pred_check_branch
          %574 = sbr.rel (%p572) target = $region100
        $region99: #{tpu_custom_call.1} parent=59 // pred_region
          %575 = dma.done [#allocation19], 16
        $region100: #{tpu_custom_call.1} parent=59 // pred_fallthru
          _
        %s576 = sand.u32 %s56, 1
        %s577 = scalar_lea.sflag [#allocation4], %s576
        %s578 = sand.u32 %s56, 1
        %s579 = smul.addr %s578, 96
        %s580 = scalar_lea.vmem [#allocation3], %s579
        %p581 = pneg %p69
        %p582 = pneg %p66
        %s583 = sand.u32 %s34, 1
        %s584 = scalar_lea.sflag [#allocation7], %s583
        %s585 = sand.u32 %s88, 1
        %s586 = smul.addr %s585, 48
        %s587 = scalar_lea.vmem [#allocation6], %s586
        %p588 = pneg %p101
        %p589 = pneg %p98
        %p590 = pneg %p122
        %p591 = pneg %p119
        %p592 = pneg %p143
        %p593 = pneg %p140
        %p594 = pneg %p164
        %p595 = pneg %p161
        %p596 = pneg %p185
        %p597 = pneg %p182
        %p598 = pneg %p206
        %p599 = pneg %p203
        %p600 = pneg %p227
        %p601 = pneg %p224
        %p602 = pneg %p248
        %p603 = pneg %p245
        %p604 = pneg %p269
        %p605 = pneg %p266
        %p606 = pneg %p297
        %p607 = pneg %p294
        %s608 = sand.u32 %s284, 1
        %s609 = scalar_lea.sflag [#allocation5], %s608
        %s610 = sand.u32 %s284, 1
        %s611 = smul.addr %s610, 64
        %s612 = scalar_lea.vmem [#allocation20], %s611
        %s613 = smul.u32 2, %s38
        %s614 = smul.u32 4, %s39
        %s615 = ssub.s32 18, %s614
        %p616 = scmp.lt.s32.totalorder %s615, 4
        %s617 = scalar_select %p616, %s615, 4
        %s618 = smul.u32 128, %s617
        %s619 = smul.u32 %s618, 3
        %s620 = sadd.s32 %s39, 1
        %s621 = smul.u32 %s620, 2
        %s622 = smul.u32 2, %s38
        %s623 = smul.u32 2, %s621
        %s624 = smul.u32 2, %s38
        %s625 = smul.u32 4, %s39
        %v627 = vld [vmem:[%s530] sm:$0xf]
        %v628 = vld [vmem:[%s530 + $0x4] sm:$0xf]
        %v629 = vld [vmem:[%s530 + $0x8] sm:$0x1]
        %v630 = vld [vmem:[%s530 + $0xc] sm:$0xf]
        %v631 = vld [vmem:[%s530 + $0x10] sm:$0xf]
        %v632 = vld [vmem:[%s530 + $0x14] sm:$0x1]
        %v633 = vld [vmem:[%s530 + $0x18] sm:$0xf]
        %v634 = vld [vmem:[%s530 + $0x1c] sm:$0xf]
        %v635 = vld [vmem:[%s530 + $0x20] sm:$0x1]
        %v636 = vld [vmem:[%s530 + $0x24] sm:$0xf]
        %v637 = vld [vmem:[%s530 + $0x28] sm:$0xf]
        %v638 = vld [vmem:[%s530 + $0x2c] sm:$0x1]
        %v639 = vld [vmem:[%s530 + $0x30] sm:$0xf]
        %v640 = vld [vmem:[%s530 + $0x34] sm:$0xf]
        %v641 = vld [vmem:[%s530 + $0x38] sm:$0x1]
        %v642 = vld [vmem:[%s530 + $0x3c] sm:$0xf]
        %v643 = vld [vmem:[%s530 + $0x40] sm:$0xf]
        %v644 = vld [vmem:[%s530 + $0x44] sm:$0x1]
        %v645 = vld [vmem:[%s530 + $0x48] sm:$0xf]
        %v646 = vld [vmem:[%s530 + $0x4c] sm:$0xf]
        %v647 = vld [vmem:[%s530 + $0x50] sm:$0x1]
        %v648 = vld [vmem:[%s530 + $0x54] sm:$0xf]
        %v649 = vld [vmem:[%s530 + $0x58] sm:$0xf]
        %v650 = vld [vmem:[%s530 + $0x5c] sm:$0x1]
        %v651 = vunpack.c.l.bf16 %v627
        %v652 = vunpack.c.l.bf16 %v628
        %v653 = vunpack.c.l.bf16 %v629
        %v654 = vunpack.c.l.bf16 %v630
        %v655 = vunpack.c.l.bf16 %v631
        %v656 = vunpack.c.l.bf16 %v632
        %v657 = vunpack.c.l.bf16 %v633
        %v658 = vunpack.c.l.bf16 %v634
        %v659 = vunpack.c.l.bf16 %v635
        %v660 = vunpack.c.l.bf16 %v636
        %v661 = vunpack.c.l.bf16 %v637
        %v662 = vunpack.c.l.bf16 %v638
        %v663 = vunpack.c.l.bf16 %v639
        %v664 = vunpack.c.l.bf16 %v640
        %v665 = vunpack.c.l.bf16 %v641
        %v666 = vunpack.c.l.bf16 %v642
        %v667 = vunpack.c.l.bf16 %v643
        %v668 = vunpack.c.l.bf16 %v644
        %v669 = vunpack.c.l.bf16 %v645
        %v670 = vunpack.c.l.bf16 %v646
        %v671 = vunpack.c.l.bf16 %v647
        %v672 = vunpack.c.l.bf16 %v648
        %v673 = vunpack.c.l.bf16 %v649
        %v674 = vunpack.c.l.bf16 %v650
        %675 = vst [vmem:[#allocation2] sm:$0xff] %v651
        %676 = vst [vmem:[#allocation2 + $0x8] sm:$0xff] %v652
        %677 = vst [vmem:[#allocation2 + $0x10] sm:$0x3] %v653
        %678 = vst [vmem:[#allocation2 + $0x18] sm:$0xff] %v654
        %679 = vst [vmem:[#allocation2 + $0x20] sm:$0xff] %v655
        %680 = vst [vmem:[#allocation2 + $0x28] sm:$0x3] %v656
        %681 = vst [vmem:[#allocation2 + $0x30] sm:$0xff] %v657
        %682 = vst [vmem:[#allocation2 + $0x38] sm:$0xff] %v658
        %683 = vst [vmem:[#allocation2 + $0x40] sm:$0x3] %v659
        %684 = vst [vmem:[#allocation2 + $0x48] sm:$0xff] %v660
        %685 = vst [vmem:[#allocation2 + $0x50] sm:$0xff] %v661
        %686 = vst [vmem:[#allocation2 + $0x58] sm:$0x3] %v662
        %687 = vst [vmem:[#allocation2 + $0x90] sm:$0xff] %v663
        %688 = vst [vmem:[#allocation2 + $0x98] sm:$0xff] %v664
        %689 = vst [vmem:[#allocation2 + $0xa0] sm:$0x3] %v665
        %690 = vst [vmem:[#allocation2 + $0xa8] sm:$0xff] %v666
        %691 = vst [vmem:[#allocation2 + $0xb0] sm:$0xff] %v667
        %692 = vst [vmem:[#allocation2 + $0xb8] sm:$0x3] %v668
        %693 = vst [vmem:[#allocation2 + $0xc0] sm:$0xff] %v669
        %694 = vst [vmem:[#allocation2 + $0xc8] sm:$0xff] %v670
        %695 = vst [vmem:[#allocation2 + $0xd0] sm:$0x3] %v671
        %696 = vst [vmem:[#allocation2 + $0xd8] sm:$0xff] %v672
        %697 = vst [vmem:[#allocation2 + $0xe0] sm:$0xff] %v673
        %698 = vst [vmem:[#allocation2 + $0xe8] sm:$0x3] %v674
        %v699 = vld [vmem:[%s539] sm:$0xf]
        %v700 = vld [vmem:[%s539 + $0x4] sm:$0xf]
        %v701 = vld [vmem:[%s539 + $0x8] sm:$0x1]
        %v702 = vld [vmem:[%s539 + $0xc] sm:$0xf]
        %v703 = vld [vmem:[%s539 + $0x10] sm:$0xf]
        %v704 = vld [vmem:[%s539 + $0x14] sm:$0x1]
        %v705 = vld [vmem:[%s539 + $0x18] sm:$0xf]
        %v706 = vld [vmem:[%s539 + $0x1c] sm:$0xf]
        %v707 = vld [vmem:[%s539 + $0x20] sm:$0x1]
        %v708 = vld [vmem:[%s539 + $0x24] sm:$0xf]
        %v709 = vld [vmem:[%s539 + $0x28] sm:$0xf]
        %v710 = vld [vmem:[%s539 + $0x2c] sm:$0x1]
        %v711 = vunpack.c.l.bf16 %v699
        %v712 = vunpack.c.l.bf16 %v700
        %v713 = vunpack.c.l.bf16 %v701
        %v714 = vunpack.c.l.bf16 %v702
        %v715 = vunpack.c.l.bf16 %v703
        %v716 = vunpack.c.l.bf16 %v704
        %v717 = vunpack.c.l.bf16 %v705
        %v718 = vunpack.c.l.bf16 %v706
        %v719 = vunpack.c.l.bf16 %v707
        %v720 = vunpack.c.l.bf16 %v708
        %v721 = vunpack.c.l.bf16 %v709
        %v722 = vunpack.c.l.bf16 %v710
        %s723 = scalar_lea.vmem [#allocation2], 96
        %724 = vst [vmem:[%s723] sm:$0xff] %v711
        %725 = vst [vmem:[%s723 + $0x8] sm:$0xff] %v712
        %726 = vst [vmem:[%s723 + $0x10] sm:$0x3] %v713
        %727 = vst [vmem:[%s723 + $0x18] sm:$0xff] %v714
        %728 = vst [vmem:[%s723 + $0x20] sm:$0xff] %v715
        %729 = vst [vmem:[%s723 + $0x28] sm:$0x3] %v716
        %730 = vst [vmem:[%s723 + $0x90] sm:$0xff] %v717
        %731 = vst [vmem:[%s723 + $0x98] sm:$0xff] %v718
        %732 = vst [vmem:[%s723 + $0xa0] sm:$0x3] %v719
        %733 = vst [vmem:[%s723 + $0xa8] sm:$0xff] %v720
        %734 = vst [vmem:[%s723 + $0xb0] sm:$0xff] %v721
        %735 = vst [vmem:[%s723 + $0xb8] sm:$0x3] %v722
        %v736 = vld [vmem:[#allocation8] sm:$0xff]
        %v737 = vld [vmem:[#allocation8 + $0x8] sm:$0x1]
        %v738 = vld [vmem:[#allocation2] sm:$0xff]
        %v739 = vld [vmem:[#allocation2 + $0x8] sm:$0xff]
        %v740 = vld [vmem:[#allocation2 + $0x18] sm:$0xff]
        %v741 = vld [vmem:[#allocation2 + $0x20] sm:$0xff]
        %v742 = vld [vmem:[#allocation2 + $0x30] sm:$0xff]
        %v743 = vld [vmem:[#allocation2 + $0x38] sm:$0xff]
        %v744 = vld [vmem:[#allocation2 + $0x48] sm:$0xff]
        %v745 = vld [vmem:[#allocation2 + $0x50] sm:$0xff]
        %v746 = vld [vmem:[#allocation2 + $0x90] sm:$0xff]
        %v747 = vld [vmem:[#allocation2 + $0x98] sm:$0xff]
        %v748 = vld [vmem:[#allocation2 + $0xa8] sm:$0xff]
        %v749 = vld [vmem:[#allocation2 + $0xb0] sm:$0xff]
        %v750 = vld [vmem:[#allocation2 + $0xc0] sm:$0xff]
        %v751 = vld [vmem:[#allocation2 + $0xc8] sm:$0xff]
        %v752 = vld [vmem:[#allocation2 + $0xd8] sm:$0xff]
        %v753 = vld [vmem:[#allocation2 + $0xe0] sm:$0xff]
        %v754 = vlaneseq
        %v755 = vshrl.u32 %v754, 7
        %v756 = vsub.s32 0, %v755
        %v757 = vrot.slane %v736, %v756
        %v758 = vmul.f32 %v738, %v757
        %v759 = vmul.f32 %v739, %v757
        %v760 = vmul.f32 %v740, %v757
        %v761 = vmul.f32 %v741, %v757
        %v762 = vmul.f32 %v742, %v757
        %v763 = vmul.f32 %v743, %v757
        %v764 = vmul.f32 %v744, %v757
        %v765 = vmul.f32 %v745, %v757
        %v766 = vmul.f32 %v746, %v757
        %v767 = vmul.f32 %v747, %v757
        %v768 = vmul.f32 %v748, %v757
        %v769 = vmul.f32 %v749, %v757
        %v770 = vmul.f32 %v750, %v757
        %v771 = vmul.f32 %v751, %v757
        %v772 = vmul.f32 %v752, %v757
        %v773 = vmul.f32 %v753, %v757
        %v774 = vadd.f32 %v758, 0.0
        %v775 = vadd.f32 %v759, 0.0
        %v776 = vadd.f32 %v760, 0.0
        %v777 = vadd.f32 %v761, 0.0
        %v778 = vadd.f32 %v762, 0.0
        %v779 = vadd.f32 %v763, 0.0
        %v780 = vadd.f32 %v764, 0.0
        %v781 = vadd.f32 %v765, 0.0
        %v782 = vadd.f32 %v766, 0.0
        %v783 = vadd.f32 %v767, 0.0
        %v784 = vadd.f32 %v768, 0.0
        %v785 = vadd.f32 %v769, 0.0
        %v786 = vadd.f32 %v770, 0.0
        %v787 = vadd.f32 %v771, 0.0
        %v788 = vadd.f32 %v772, 0.0
        %v789 = vadd.f32 %v773, 0.0
        %v790 = vld [vmem:[#allocation2 + $0x1] sm:$0xff]
        %v791 = vld [vmem:[#allocation2 + $0x9] sm:$0xff]
        %v792 = vld [vmem:[#allocation2 + $0x19] sm:$0xff]
        %v793 = vld [vmem:[#allocation2 + $0x21] sm:$0xff]
        %v794 = vld [vmem:[#allocation2 + $0x31] sm:$0xff]
        %v795 = vld [vmem:[#allocation2 + $0x39] sm:$0xff]
        %v796 = vld [vmem:[#allocation2 + $0x49] sm:$0xff]
        %v797 = vld [vmem:[#allocation2 + $0x51] sm:$0xff]
        %v798 = vld [vmem:[#allocation2 + $0x91] sm:$0xff]
        %v799 = vld [vmem:[#allocation2 + $0x99] sm:$0xff]
        %v800 = vld [vmem:[#allocation2 + $0xa9] sm:$0xff]
        %v801 = vld [vmem:[#allocation2 + $0xb1] sm:$0xff]
        %v802 = vld [vmem:[#allocation2 + $0xc1] sm:$0xff]
        %v803 = vld [vmem:[#allocation2 + $0xc9] sm:$0xff]
        %v804 = vld [vmem:[#allocation2 + $0xd9] sm:$0xff]
        %v805 = vld [vmem:[#allocation2 + $0xe1] sm:$0xff]
        %v806 = vlaneseq
        %v807 = vshrl.u32 %v806, 7
        %v808 = vsub.s32 1, %v807
        %v809 = vrot.slane %v736, %v808
        %v810 = vmul.f32 %v790, %v809
        %v811 = vmul.f32 %v791, %v809
        %v812 = vmul.f32 %v792, %v809
        %v813 = vmul.f32 %v793, %v809
        %v814 = vmul.f32 %v794, %v809
        %v815 = vmul.f32 %v795, %v809
        %v816 = vmul.f32 %v796, %v809
        %v817 = vmul.f32 %v797, %v809
        %v818 = vmul.f32 %v798, %v809
        %v819 = vmul.f32 %v799, %v809
        %v820 = vmul.f32 %v800, %v809
        %v821 = vmul.f32 %v801, %v809
        %v822 = vmul.f32 %v802, %v809
        %v823 = vmul.f32 %v803, %v809
        %v824 = vmul.f32 %v804, %v809
        %v825 = vmul.f32 %v805, %v809
        %v826 = vadd.f32 %v774, %v810
        %v827 = vadd.f32 %v775, %v811
        %v828 = vadd.f32 %v776, %v812
        %v829 = vadd.f32 %v777, %v813
        %v830 = vadd.f32 %v778, %v814
        %v831 = vadd.f32 %v779, %v815
        %v832 = vadd.f32 %v780, %v816
        %v833 = vadd.f32 %v781, %v817
        %v834 = vadd.f32 %v782, %v818
        %v835 = vadd.f32 %v783, %v819
        %v836 = vadd.f32 %v784, %v820
        %v837 = vadd.f32 %v785, %v821
        %v838 = vadd.f32 %v786, %v822
        %v839 = vadd.f32 %v787, %v823
        %v840 = vadd.f32 %v788, %v824
        %v841 = vadd.f32 %v789, %v825
        %v842 = vld [vmem:[#allocation2 + $0x2] sm:$0xff]
        %v843 = vld [vmem:[#allocation2 + $0xa] sm:$0xff]
        %v844 = vld [vmem:[#allocation2 + $0x1a] sm:$0xff]
        %v845 = vld [vmem:[#allocation2 + $0x22] sm:$0xff]
        %v846 = vld [vmem:[#allocation2 + $0x32] sm:$0xff]
        %v847 = vld [vmem:[#allocation2 + $0x3a] sm:$0xff]
        %v848 = vld [vmem:[#allocation2 + $0x4a] sm:$0xff]
        %v849 = vld [vmem:[#allocation2 + $0x52] sm:$0xff]
        %v850 = vld [vmem:[#allocation2 + $0x92] sm:$0xff]
        %v851 = vld [vmem:[#allocation2 + $0x9a] sm:$0xff]
        %v852 = vld [vmem:[#allocation2 + $0xaa] sm:$0xff]
        %v853 = vld [vmem:[#allocation2 + $0xb2] sm:$0xff]
        %v854 = vld [vmem:[#allocation2 + $0xc2] sm:$0xff]
        %v855 = vld [vmem:[#allocation2 + $0xca] sm:$0xff]
        %v856 = vld [vmem:[#allocation2 + $0xda] sm:$0xff]
        %v857 = vld [vmem:[#allocation2 + $0xe2] sm:$0xff]
        %v858 = vlaneseq
        %v859 = vshrl.u32 %v858, 7
        %v860 = vsub.s32 2, %v859
        %v861 = vrot.slane %v736, %v860
        %v862 = vmul.f32 %v842, %v861
        %v863 = vmul.f32 %v843, %v861
        %v864 = vmul.f32 %v844, %v861
        %v865 = vmul.f32 %v845, %v861
        %v866 = vmul.f32 %v846, %v861
        %v867 = vmul.f32 %v847, %v861
        %v868 = vmul.f32 %v848, %v861
        %v869 = vmul.f32 %v849, %v861
        %v870 = vmul.f32 %v850, %v861
        %v871 = vmul.f32 %v851, %v861
        %v872 = vmul.f32 %v852, %v861
        %v873 = vmul.f32 %v853, %v861
        %v874 = vmul.f32 %v854, %v861
        %v875 = vmul.f32 %v855, %v861
        %v876 = vmul.f32 %v856, %v861
        %v877 = vmul.f32 %v857, %v861
        %v878 = vadd.f32 %v826, %v862
        %v879 = vadd.f32 %v827, %v863
        %v880 = vadd.f32 %v828, %v864
        %v881 = vadd.f32 %v829, %v865
        %v882 = vadd.f32 %v830, %v866
        %v883 = vadd.f32 %v831, %v867
        %v884 = vadd.f32 %v832, %v868
        %v885 = vadd.f32 %v833, %v869
        %v886 = vadd.f32 %v834, %v870
        %v887 = vadd.f32 %v835, %v871
        %v888 = vadd.f32 %v836, %v872
        %v889 = vadd.f32 %v837, %v873
        %v890 = vadd.f32 %v838, %v874
        %v891 = vadd.f32 %v839, %v875
        %v892 = vadd.f32 %v840, %v876
        %v893 = vadd.f32 %v841, %v877
        %s894 = scalar_lea.vmem [#allocation2], 24
        %v895 = vld [vmem:[%s894] sm:$0xff]
        %v896 = vld [vmem:[%s894 + $0x8] sm:$0xff]
        %v897 = vld [vmem:[%s894 + $0x18] sm:$0xff]
        %v898 = vld [vmem:[%s894 + $0x20] sm:$0xff]
        %v899 = vld [vmem:[%s894 + $0x30] sm:$0xff]
        %v900 = vld [vmem:[%s894 + $0x38] sm:$0xff]
        %v901 = vld [vmem:[%s894 + $0x48] sm:$0xff]
        %v902 = vld [vmem:[%s894 + $0x50] sm:$0xff]
        %v903 = vld [vmem:[%s894 + $0x90] sm:$0xff]
        %v904 = vld [vmem:[%s894 + $0x98] sm:$0xff]
        %v905 = vld [vmem:[%s894 + $0xa8] sm:$0xff]
        %v906 = vld [vmem:[%s894 + $0xb0] sm:$0xff]
        %v907 = vld [vmem:[%s894 + $0xc0] sm:$0xff]
        %v908 = vld [vmem:[%s894 + $0xc8] sm:$0xff]
        %v909 = vld [vmem:[%s894 + $0xd8] sm:$0xff]
        %v910 = vld [vmem:[%s894 + $0xe0] sm:$0xff]
        %v911 = vlaneseq
        %v912 = vshrl.u32 %v911, 7
        %v913 = vsub.s32 3, %v912
        %v914 = vrot.slane %v736, %v913
        %v915 = vmul.f32 %v895, %v914
        %v916 = vmul.f32 %v896, %v914
        %v917 = vmul.f32 %v897, %v914
        %v918 = vmul.f32 %v898, %v914
        %v919 = vmul.f32 %v899, %v914
        %v920 = vmul.f32 %v900, %v914
        %v921 = vmul.f32 %v901, %v914
        %v922 = vmul.f32 %v902, %v914
        %v923 = vmul.f32 %v903, %v914
        %v924 = vmul.f32 %v904, %v914
        %v925 = vmul.f32 %v905, %v914
        %v926 = vmul.f32 %v906, %v914
        %v927 = vmul.f32 %v907, %v914
        %v928 = vmul.f32 %v908, %v914
        %v929 = vmul.f32 %v909, %v914
        %v930 = vmul.f32 %v910, %v914
        %v931 = vadd.f32 %v878, %v915
        %v932 = vadd.f32 %v879, %v916
        %v933 = vadd.f32 %v880, %v917
        %v934 = vadd.f32 %v881, %v918
        %v935 = vadd.f32 %v882, %v919
        %v936 = vadd.f32 %v883, %v920
        %v937 = vadd.f32 %v884, %v921
        %v938 = vadd.f32 %v885, %v922
        %v939 = vadd.f32 %v886, %v923
        %v940 = vadd.f32 %v887, %v924
        %v941 = vadd.f32 %v888, %v925
        %v942 = vadd.f32 %v889, %v926
        %v943 = vadd.f32 %v890, %v927
        %v944 = vadd.f32 %v891, %v928
        %v945 = vadd.f32 %v892, %v929
        %v946 = vadd.f32 %v893, %v930
        %v947 = vld [vmem:[%s894 + $0x1] sm:$0xff]
        %v948 = vld [vmem:[%s894 + $0x9] sm:$0xff]
        %v949 = vld [vmem:[%s894 + $0x19] sm:$0xff]
        %v950 = vld [vmem:[%s894 + $0x21] sm:$0xff]
        %v951 = vld [vmem:[%s894 + $0x31] sm:$0xff]
        %v952 = vld [vmem:[%s894 + $0x39] sm:$0xff]
        %v953 = vld [vmem:[%s894 + $0x49] sm:$0xff]
        %v954 = vld [vmem:[%s894 + $0x51] sm:$0xff]
        %v955 = vld [vmem:[%s894 + $0x91] sm:$0xff]
        %v956 = vld [vmem:[%s894 + $0x99] sm:$0xff]
        %v957 = vld [vmem:[%s894 + $0xa9] sm:$0xff]
        %v958 = vld [vmem:[%s894 + $0xb1] sm:$0xff]
        %v959 = vld [vmem:[%s894 + $0xc1] sm:$0xff]
        %v960 = vld [vmem:[%s894 + $0xc9] sm:$0xff]
        %v961 = vld [vmem:[%s894 + $0xd9] sm:$0xff]
        %v962 = vld [vmem:[%s894 + $0xe1] sm:$0xff]
        %v963 = vlaneseq
        %v964 = vshrl.u32 %v963, 7
        %v965 = vsub.s32 4, %v964
        %v966 = vrot.slane %v736, %v965
        %v967 = vmul.f32 %v947, %v966
        %v968 = vmul.f32 %v948, %v966
        %v969 = vmul.f32 %v949, %v966
        %v970 = vmul.f32 %v950, %v966
        %v971 = vmul.f32 %v951, %v966
        %v972 = vmul.f32 %v952, %v966
        %v973 = vmul.f32 %v953, %v966
        %v974 = vmul.f32 %v954, %v966
        %v975 = vmul.f32 %v955, %v966
        %v976 = vmul.f32 %v956, %v966
        %v977 = vmul.f32 %v957, %v966
        %v978 = vmul.f32 %v958, %v966
        %v979 = vmul.f32 %v959, %v966
        %v980 = vmul.f32 %v960, %v966
        %v981 = vmul.f32 %v961, %v966
        %v982 = vmul.f32 %v962, %v966
        %v983 = vadd.f32 %v931, %v967
        %v984 = vadd.f32 %v932, %v968
        %v985 = vadd.f32 %v933, %v969
        %v986 = vadd.f32 %v934, %v970
        %v987 = vadd.f32 %v935, %v971
        %v988 = vadd.f32 %v936, %v972
        %v989 = vadd.f32 %v937, %v973
        %v990 = vadd.f32 %v938, %v974
        %v991 = vadd.f32 %v939, %v975
        %v992 = vadd.f32 %v940, %v976
        %v993 = vadd.f32 %v941, %v977
        %v994 = vadd.f32 %v942, %v978
        %v995 = vadd.f32 %v943, %v979
        %v996 = vadd.f32 %v944, %v980
        %v997 = vadd.f32 %v945, %v981
        %v998 = vadd.f32 %v946, %v982
        %v999 = vld [vmem:[%s894 + $0x2] sm:$0xff]
        %v1000 = vld [vmem:[%s894 + $0xa] sm:$0xff]
        %v1001 = vld [vmem:[%s894 + $0x1a] sm:$0xff]
        %v1002 = vld [vmem:[%s894 + $0x22] sm:$0xff]
        %v1003 = vld [vmem:[%s894 + $0x32] sm:$0xff]
        %v1004 = vld [vmem:[%s894 + $0x3a] sm:$0xff]
        %v1005 = vld [vmem:[%s894 + $0x4a] sm:$0xff]
        %v1006 = vld [vmem:[%s894 + $0x52] sm:$0xff]
        %v1007 = vld [vmem:[%s894 + $0x92] sm:$0xff]
        %v1008 = vld [vmem:[%s894 + $0x9a] sm:$0xff]
        %v1009 = vld [vmem:[%s894 + $0xaa] sm:$0xff]
        %v1010 = vld [vmem:[%s894 + $0xb2] sm:$0xff]
        %v1011 = vld [vmem:[%s894 + $0xc2] sm:$0xff]
        %v1012 = vld [vmem:[%s894 + $0xca] sm:$0xff]
        %v1013 = vld [vmem:[%s894 + $0xda] sm:$0xff]
        %v1014 = vld [vmem:[%s894 + $0xe2] sm:$0xff]
        %v1015 = vlaneseq
        %v1016 = vshrl.u32 %v1015, 7
        %v1017 = vsub.s32 5, %v1016
        %v1018 = vrot.slane %v736, %v1017
        %v1019 = vmul.f32 %v999, %v1018
        %v1020 = vmul.f32 %v1000, %v1018
        %v1021 = vmul.f32 %v1001, %v1018
        %v1022 = vmul.f32 %v1002, %v1018
        %v1023 = vmul.f32 %v1003, %v1018
        %v1024 = vmul.f32 %v1004, %v1018
        %v1025 = vmul.f32 %v1005, %v1018
        %v1026 = vmul.f32 %v1006, %v1018
        %v1027 = vmul.f32 %v1007, %v1018
        %v1028 = vmul.f32 %v1008, %v1018
        %v1029 = vmul.f32 %v1009, %v1018
        %v1030 = vmul.f32 %v1010, %v1018
        %v1031 = vmul.f32 %v1011, %v1018
        %v1032 = vmul.f32 %v1012, %v1018
        %v1033 = vmul.f32 %v1013, %v1018
        %v1034 = vmul.f32 %v1014, %v1018
        %v1035 = vadd.f32 %v983, %v1019
        %v1036 = vadd.f32 %v984, %v1020
        %v1037 = vadd.f32 %v985, %v1021
        %v1038 = vadd.f32 %v986, %v1022
        %v1039 = vadd.f32 %v987, %v1023
        %v1040 = vadd.f32 %v988, %v1024
        %v1041 = vadd.f32 %v989, %v1025
        %v1042 = vadd.f32 %v990, %v1026
        %v1043 = vadd.f32 %v991, %v1027
        %v1044 = vadd.f32 %v992, %v1028
        %v1045 = vadd.f32 %v993, %v1029
        %v1046 = vadd.f32 %v994, %v1030
        %v1047 = vadd.f32 %v995, %v1031
        %v1048 = vadd.f32 %v996, %v1032
        %v1049 = vadd.f32 %v997, %v1033
        %v1050 = vadd.f32 %v998, %v1034
        %s1051 = scalar_lea.vmem [#allocation2], 48
        %v1052 = vld [vmem:[%s1051] sm:$0xff]
        %v1053 = vld [vmem:[%s1051 + $0x8] sm:$0xff]
        %v1054 = vld [vmem:[%s1051 + $0x18] sm:$0xff]
        %v1055 = vld [vmem:[%s1051 + $0x20] sm:$0xff]
        %v1056 = vld [vmem:[%s1051 + $0x30] sm:$0xff]
        %v1057 = vld [vmem:[%s1051 + $0x38] sm:$0xff]
        %v1058 = vld [vmem:[%s1051 + $0x48] sm:$0xff]
        %v1059 = vld [vmem:[%s1051 + $0x50] sm:$0xff]
        %v1060 = vld [vmem:[%s1051 + $0x90] sm:$0xff]
        %v1061 = vld [vmem:[%s1051 + $0x98] sm:$0xff]
        %v1062 = vld [vmem:[%s1051 + $0xa8] sm:$0xff]
        %v1063 = vld [vmem:[%s1051 + $0xb0] sm:$0xff]
        %v1064 = vld [vmem:[%s1051 + $0xc0] sm:$0xff]
        %v1065 = vld [vmem:[%s1051 + $0xc8] sm:$0xff]
        %v1066 = vld [vmem:[%s1051 + $0xd8] sm:$0xff]
        %v1067 = vld [vmem:[%s1051 + $0xe0] sm:$0xff]
        %v1068 = vlaneseq
        %v1069 = vshrl.u32 %v1068, 7
        %v1070 = vsub.s32 6, %v1069
        %v1071 = vrot.slane %v736, %v1070
        %v1072 = vmul.f32 %v1052, %v1071
        %v1073 = vmul.f32 %v1053, %v1071
        %v1074 = vmul.f32 %v1054, %v1071
        %v1075 = vmul.f32 %v1055, %v1071
        %v1076 = vmul.f32 %v1056, %v1071
        %v1077 = vmul.f32 %v1057, %v1071
        %v1078 = vmul.f32 %v1058, %v1071
        %v1079 = vmul.f32 %v1059, %v1071
        %v1080 = vmul.f32 %v1060, %v1071
        %v1081 = vmul.f32 %v1061, %v1071
        %v1082 = vmul.f32 %v1062, %v1071
        %v1083 = vmul.f32 %v1063, %v1071
        %v1084 = vmul.f32 %v1064, %v1071
        %v1085 = vmul.f32 %v1065, %v1071
        %v1086 = vmul.f32 %v1066, %v1071
        %v1087 = vmul.f32 %v1067, %v1071
        %v1088 = vadd.f32 %v1035, %v1072
        %v1089 = vadd.f32 %v1036, %v1073
        %v1090 = vadd.f32 %v1037, %v1074
        %v1091 = vadd.f32 %v1038, %v1075
        %v1092 = vadd.f32 %v1039, %v1076
        %v1093 = vadd.f32 %v1040, %v1077
        %v1094 = vadd.f32 %v1041, %v1078
        %v1095 = vadd.f32 %v1042, %v1079
        %v1096 = vadd.f32 %v1043, %v1080
        %v1097 = vadd.f32 %v1044, %v1081
        %v1098 = vadd.f32 %v1045, %v1082
        %v1099 = vadd.f32 %v1046, %v1083
        %v1100 = vadd.f32 %v1047, %v1084
        %v1101 = vadd.f32 %v1048, %v1085
        %v1102 = vadd.f32 %v1049, %v1086
        %v1103 = vadd.f32 %v1050, %v1087
        %v1104 = vld [vmem:[%s1051 + $0x1] sm:$0xff]
        %v1105 = vld [vmem:[%s1051 + $0x9] sm:$0xff]
        %v1106 = vld [vmem:[%s1051 + $0x19] sm:$0xff]
        %v1107 = vld [vmem:[%s1051 + $0x21] sm:$0xff]
        %v1108 = vld [vmem:[%s1051 + $0x31] sm:$0xff]
        %v1109 = vld [vmem:[%s1051 + $0x39] sm:$0xff]
        %v1110 = vld [vmem:[%s1051 + $0x49] sm:$0xff]
        %v1111 = vld [vmem:[%s1051 + $0x51] sm:$0xff]
        %v1112 = vld [vmem:[%s1051 + $0x91] sm:$0xff]
        %v1113 = vld [vmem:[%s1051 + $0x99] sm:$0xff]
        %v1114 = vld [vmem:[%s1051 + $0xa9] sm:$0xff]
        %v1115 = vld [vmem:[%s1051 + $0xb1] sm:$0xff]
        %v1116 = vld [vmem:[%s1051 + $0xc1] sm:$0xff]
        %v1117 = vld [vmem:[%s1051 + $0xc9] sm:$0xff]
        %v1118 = vld [vmem:[%s1051 + $0xd9] sm:$0xff]
        %v1119 = vld [vmem:[%s1051 + $0xe1] sm:$0xff]
        %v1120 = vlaneseq
        %v1121 = vshrl.u32 %v1120, 7
        %v1122 = vsub.s32 7, %v1121
        %v1123 = vrot.slane %v736, %v1122
        %v1124 = vmul.f32 %v1104, %v1123
        %v1125 = vmul.f32 %v1105, %v1123
        %v1126 = vmul.f32 %v1106, %v1123
        %v1127 = vmul.f32 %v1107, %v1123
        %v1128 = vmul.f32 %v1108, %v1123
        %v1129 = vmul.f32 %v1109, %v1123
        %v1130 = vmul.f32 %v1110, %v1123
        %v1131 = vmul.f32 %v1111, %v1123
        %v1132 = vmul.f32 %v1112, %v1123
        %v1133 = vmul.f32 %v1113, %v1123
        %v1134 = vmul.f32 %v1114, %v1123
        %v1135 = vmul.f32 %v1115, %v1123
        %v1136 = vmul.f32 %v1116, %v1123
        %v1137 = vmul.f32 %v1117, %v1123
        %v1138 = vmul.f32 %v1118, %v1123
        %v1139 = vmul.f32 %v1119, %v1123
        %v1140 = vadd.f32 %v1088, %v1124
        %v1141 = vadd.f32 %v1089, %v1125
        %v1142 = vadd.f32 %v1090, %v1126
        %v1143 = vadd.f32 %v1091, %v1127
        %v1144 = vadd.f32 %v1092, %v1128
        %v1145 = vadd.f32 %v1093, %v1129
        %v1146 = vadd.f32 %v1094, %v1130
        %v1147 = vadd.f32 %v1095, %v1131
        %v1148 = vadd.f32 %v1096, %v1132
        %v1149 = vadd.f32 %v1097, %v1133
        %v1150 = vadd.f32 %v1098, %v1134
        %v1151 = vadd.f32 %v1099, %v1135
        %v1152 = vadd.f32 %v1100, %v1136
        %v1153 = vadd.f32 %v1101, %v1137
        %v1154 = vadd.f32 %v1102, %v1138
        %v1155 = vadd.f32 %v1103, %v1139
        %v1156 = vld [vmem:[%s1051 + $0x2] sm:$0xff]
        %v1157 = vld [vmem:[%s1051 + $0xa] sm:$0xff]
        %v1158 = vld [vmem:[%s1051 + $0x1a] sm:$0xff]
        %v1159 = vld [vmem:[%s1051 + $0x22] sm:$0xff]
        %v1160 = vld [vmem:[%s1051 + $0x32] sm:$0xff]
        %v1161 = vld [vmem:[%s1051 + $0x3a] sm:$0xff]
        %v1162 = vld [vmem:[%s1051 + $0x4a] sm:$0xff]
        %v1163 = vld [vmem:[%s1051 + $0x52] sm:$0xff]
        %v1164 = vld [vmem:[%s1051 + $0x92] sm:$0xff]
        %v1165 = vld [vmem:[%s1051 + $0x9a] sm:$0xff]
        %v1166 = vld [vmem:[%s1051 + $0xaa] sm:$0xff]
        %v1167 = vld [vmem:[%s1051 + $0xb2] sm:$0xff]
        %v1168 = vld [vmem:[%s1051 + $0xc2] sm:$0xff]
        %v1169 = vld [vmem:[%s1051 + $0xca] sm:$0xff]
        %v1170 = vld [vmem:[%s1051 + $0xda] sm:$0xff]
        %v1171 = vld [vmem:[%s1051 + $0xe2] sm:$0xff]
        %v1172 = vlaneseq
        %v1173 = vshrl.u32 %v1172, 7
        %v1174 = vsub.s32 0, %v1173
        %v1175 = vrot.slane %v737, %v1174
        %v1176 = vmul.f32 %v1156, %v1175
        %v1177 = vmul.f32 %v1157, %v1175
        %v1178 = vmul.f32 %v1158, %v1175
        %v1179 = vmul.f32 %v1159, %v1175
        %v1180 = vmul.f32 %v1160, %v1175
        %v1181 = vmul.f32 %v1161, %v1175
        %v1182 = vmul.f32 %v1162, %v1175
        %v1183 = vmul.f32 %v1163, %v1175
        %v1184 = vmul.f32 %v1164, %v1175
        %v1185 = vmul.f32 %v1165, %v1175
        %v1186 = vmul.f32 %v1166, %v1175
        %v1187 = vmul.f32 %v1167, %v1175
        %v1188 = vmul.f32 %v1168, %v1175
        %v1189 = vmul.f32 %v1169, %v1175
        %v1190 = vmul.f32 %v1170, %v1175
        %v1191 = vmul.f32 %v1171, %v1175
        %v1192 = vadd.f32 %v1140, %v1176
        %v1193 = vadd.f32 %v1141, %v1177
        %v1194 = vadd.f32 %v1142, %v1178
        %v1195 = vadd.f32 %v1143, %v1179
        %v1196 = vadd.f32 %v1144, %v1180
        %v1197 = vadd.f32 %v1145, %v1181
        %v1198 = vadd.f32 %v1146, %v1182
        %v1199 = vadd.f32 %v1147, %v1183
        %v1200 = vadd.f32 %v1148, %v1184
        %v1201 = vadd.f32 %v1149, %v1185
        %v1202 = vadd.f32 %v1150, %v1186
        %v1203 = vadd.f32 %v1151, %v1187
        %v1204 = vadd.f32 %v1152, %v1188
        %v1205 = vadd.f32 %v1153, %v1189
        %v1206 = vadd.f32 %v1154, %v1190
        %v1207 = vadd.f32 %v1155, %v1191
        %v1208 = vld [vmem:[#allocation9] sm:$0x1]
        %v1210 = vlaneseq
        %v1211 = vshrl.u32 %v1210, 7
        %v1212 = vsub.s32 0, %v1211
        %v1213 = vrot.slane %v1208, %v1212
        %v1215 = vmul.f32 %v1192, %v1213
        %v1216 = vmul.f32 %v1193, %v1213
        %v1217 = vmul.f32 %v1194, %v1213
        %v1218 = vmul.f32 %v1195, %v1213
        %v1219 = vmul.f32 %v1196, %v1213
        %v1220 = vmul.f32 %v1197, %v1213
        %v1221 = vmul.f32 %v1198, %v1213
        %v1222 = vmul.f32 %v1199, %v1213
        %v1223 = vmul.f32 %v1200, %v1213
        %v1224 = vmul.f32 %v1201, %v1213
        %v1225 = vmul.f32 %v1202, %v1213
        %v1226 = vmul.f32 %v1203, %v1213
        %v1227 = vmul.f32 %v1204, %v1213
        %v1228 = vmul.f32 %v1205, %v1213
        %v1229 = vmul.f32 %v1206, %v1213
        %v1230 = vmul.f32 %v1207, %v1213
        %v1231 = vld [vmem:[#allocation11] sm:$0x1]
        %v1233 = vlaneseq
        %v1234 = vshrl.u32 %v1233, 7
        %v1235 = vsub.s32 0, %v1234
        %v1236 = vrot.slane %v1231, %v1235
        %v1238 = vadd.f32 %v1215, %v1236
        %v1239 = vadd.f32 %v1216, %v1236
        %v1240 = vadd.f32 %v1217, %v1236
        %v1241 = vadd.f32 %v1218, %v1236
        %v1242 = vadd.f32 %v1219, %v1236
        %v1243 = vadd.f32 %v1220, %v1236
        %v1244 = vadd.f32 %v1221, %v1236
        %v1245 = vadd.f32 %v1222, %v1236
        %v1246 = vadd.f32 %v1223, %v1236
        %v1247 = vadd.f32 %v1224, %v1236
        %v1248 = vadd.f32 %v1225, %v1236
        %v1249 = vadd.f32 %v1226, %v1236
        %v1250 = vadd.f32 %v1227, %v1236
        %v1251 = vadd.f32 %v1228, %v1236
        %v1252 = vadd.f32 %v1229, %v1236
        %v1253 = vadd.f32 %v1230, %v1236
        %vm1254 = vcmp.ge.f32.partialorder %v1238, 0.0
        %vm1255 = vcmp.ge.f32.partialorder %v1239, 0.0
        %vm1256 = vcmp.ge.f32.partialorder %v1240, 0.0
        %vm1257 = vcmp.ge.f32.partialorder %v1241, 0.0
        %vm1258 = vcmp.ge.f32.partialorder %v1242, 0.0
        %vm1259 = vcmp.ge.f32.partialorder %v1243, 0.0
        %vm1260 = vcmp.ge.f32.partialorder %v1244, 0.0
        %vm1261 = vcmp.ge.f32.partialorder %v1245, 0.0
        %vm1262 = vcmp.ge.f32.partialorder %v1246, 0.0
        %vm1263 = vcmp.ge.f32.partialorder %v1247, 0.0
        %vm1264 = vcmp.ge.f32.partialorder %v1248, 0.0
        %vm1265 = vcmp.ge.f32.partialorder %v1249, 0.0
        %vm1266 = vcmp.ge.f32.partialorder %v1250, 0.0
        %vm1267 = vcmp.ge.f32.partialorder %v1251, 0.0
        %vm1268 = vcmp.ge.f32.partialorder %v1252, 0.0
        %vm1269 = vcmp.ge.f32.partialorder %v1253, 0.0
        %v1270 = vld [vmem:[#allocation12] sm:$0x1]
        %v1272 = vlaneseq
        %v1273 = vshrl.u32 %v1272, 7
        %v1274 = vsub.s32 0, %v1273
        %v1275 = vrot.slane %v1270, %v1274
        %v1277 = vmul.f32 %v1275, %v1238
        %v1278 = vmul.f32 %v1275, %v1239
        %v1279 = vmul.f32 %v1275, %v1240
        %v1280 = vmul.f32 %v1275, %v1241
        %v1281 = vmul.f32 %v1275, %v1242
        %v1282 = vmul.f32 %v1275, %v1243
        %v1283 = vmul.f32 %v1275, %v1244
        %v1284 = vmul.f32 %v1275, %v1245
        %v1285 = vmul.f32 %v1275, %v1246
        %v1286 = vmul.f32 %v1275, %v1247
        %v1287 = vmul.f32 %v1275, %v1248
        %v1288 = vmul.f32 %v1275, %v1249
        %v1289 = vmul.f32 %v1275, %v1250
        %v1290 = vmul.f32 %v1275, %v1251
        %v1291 = vmul.f32 %v1275, %v1252
        %v1292 = vmul.f32 %v1275, %v1253
        %v1293 = vsel %vm1254, %v1238, %v1277
        %v1294 = vsel %vm1255, %v1239, %v1278
        %v1295 = vsel %vm1256, %v1240, %v1279
        %v1296 = vsel %vm1257, %v1241, %v1280
        %v1297 = vsel %vm1258, %v1242, %v1281
        %v1298 = vsel %vm1259, %v1243, %v1282
        %v1299 = vsel %vm1260, %v1244, %v1283
        %v1300 = vsel %vm1261, %v1245, %v1284
        %v1301 = vsel %vm1262, %v1246, %v1285
        %v1302 = vsel %vm1263, %v1247, %v1286
        %v1303 = vsel %vm1264, %v1248, %v1287
        %v1304 = vsel %vm1265, %v1249, %v1288
        %v1305 = vsel %vm1266, %v1250, %v1289
        %v1306 = vsel %vm1267, %v1251, %v1290
        %v1307 = vsel %vm1268, %v1252, %v1291
        %v1308 = vsel %vm1269, %v1253, %v1292
        %v1309 = vpack.c.bf16 %v1294, %v1293
        %v1310 = vpack.c.bf16 %v1296, %v1295
        %v1311 = vpack.c.bf16 %v1298, %v1297
        %v1312 = vpack.c.bf16 %v1300, %v1299
        %v1313 = vpack.c.bf16 %v1302, %v1301
        %v1314 = vpack.c.bf16 %v1304, %v1303
        %v1315 = vpack.c.bf16 %v1306, %v1305
        %v1316 = vpack.c.bf16 %v1308, %v1307
        %v1317 = vld [vmem:[#allocation14] sm:$0xf]
        %v1318 = vld [vmem:[#allocation14 + $0x4] sm:$0xf]
        %v1319 = vld [vmem:[#allocation14 + $0x8] sm:$0xf]
        %v1320 = vld [vmem:[#allocation14 + $0xc] sm:$0xf]
        %v1321 = vld [vmem:[#allocation14 + $0x10] sm:$0xf]
        %v1322 = vld [vmem:[#allocation14 + $0x14] sm:$0xf]
        %v1323 = vld [vmem:[#allocation14 + $0x18] sm:$0xf]
        %v1324 = vld [vmem:[#allocation14 + $0x1c] sm:$0xf]
        %v1325 = vld [vmem:[#allocation14 + $0x20] sm:$0xf]
        %v1326 = vld [vmem:[#allocation14 + $0x24] sm:$0xf]
        %v1327 = vld [vmem:[#allocation14 + $0x28] sm:$0xf]
        %v1328 = vld [vmem:[#allocation14 + $0x2c] sm:$0xf]
        %v1329 = vld [vmem:[#allocation14 + $0x30] sm:$0xf]
        %v1330 = vld [vmem:[#allocation14 + $0x34] sm:$0xf]
        %v1331 = vld [vmem:[#allocation14 + $0x38] sm:$0xf]
        %v1332 = vld [vmem:[#allocation14 + $0x3c] sm:$0xf]
        %v1349 = vunpack.c.l.b16 %v1317
        %v1350 = vunpack.c.l.b16 %v1318
        %v1351 = vunpack.c.l.b16 %v1319
        %v1352 = vunpack.c.l.b16 %v1320
        %v1353 = vunpack.c.l.b16 %v1321
        %v1354 = vunpack.c.l.b16 %v1322
        %v1355 = vunpack.c.l.b16 %v1323
        %v1356 = vunpack.c.l.b16 %v1324
        %v1357 = vunpack.c.l.b16 %v1325
        %v1358 = vunpack.c.l.b16 %v1326
        %v1359 = vunpack.c.l.b16 %v1327
        %v1360 = vunpack.c.l.b16 %v1328
        %v1361 = vunpack.c.l.b16 %v1329
        %v1362 = vunpack.c.l.b16 %v1330
        %v1363 = vunpack.c.l.b16 %v1331
        %v1364 = vunpack.c.l.b16 %v1332
        %v1365 = vpack.c.b16 %v1350, %v1349
        %v1366 = vpack.c.b16 %v1352, %v1351
        %v1367 = vpack.c.b16 %v1354, %v1353
        %v1368 = vpack.c.b16 %v1356, %v1355
        %v1369 = vpack.c.b16 %v1358, %v1357
        %v1370 = vpack.c.b16 %v1360, %v1359
        %v1371 = vpack.c.b16 %v1362, %v1361
        %v1372 = vpack.c.b16 %v1364, %v1363
        %1381 = vmatprep.subr.bf16.mxu0 0
        %1382 = vmatpush1.bf16.msra.mxu0 %v1365
        %1383 = vmatprep.subr.bf16.mxu0 0
        %1384 = vmatpush1.bf16.msra.mxu0 %v1366
        %1385 = vmatprep.subr.bf16.mxu0 0
        %1386 = vmatpush1.bf16.msra.mxu0 %v1367
        %1387 = vmatprep.subr.bf16.mxu0 0
        %1388 = vmatpush1.bf16.msra.mxu0 %v1368
        %1389 = vmatprep.subr.bf16.mxu0 0
        %1390 = vmatpush1.bf16.msra.mxu0 %v1369
        %1391 = vmatprep.subr.bf16.mxu0 0
        %1392 = vmatpush1.bf16.msra.mxu0 %v1370
        %1393 = vmatprep.subr.bf16.mxu0 0
        %1394 = vmatpush1.bf16.msra.mxu0 %v1371
        %1395 = vmatprep.subr.bf16.mxu0 0
        %1396 = vmatpush1.bf16.msra.mxu0 %v1372
        %1397 = vmatprep.subr.bf16.mxu0 0
        %1398 = vmatpush1.bf16.msra.mxu0 0
        %1399 = vmatprep.subr.bf16.mxu0 0
        %1400 = vmatpush1.bf16.msra.mxu0 0
        %1401 = vmatprep.subr.bf16.mxu0 0
        %1402 = vmatpush1.bf16.msra.mxu0 0
        %1403 = vmatprep.subr.bf16.mxu0 0
        %1404 = vmatpush1.bf16.msra.mxu0 0
        %1405 = vmatprep.subr.bf16.mxu0 0
        %1406 = vmatpush1.bf16.msra.mxu0 0
        %1407 = vmatprep.subr.bf16.mxu0 0
        %1408 = vmatpush1.bf16.msra.mxu0 0
        %1409 = vmatprep.subr.bf16.mxu0 0
        %1410 = vmatpush1.bf16.msra.mxu0 0
        %1411 = vmatprep.subr.bf16.mxu0 0
        %1412 = vmatpush1.bf16.msra.mxu0 0
        %1413 = vmatprep.mubr.bf16.mxu0 0
        %1414 = vmatmul.mubr.bf16.gmra.mrb[0].mxu0 %v1309
        %v1415 = vpop.f32.mrb[0].mxu0
        %v1416 = vadd.f32 0.0, %v1415
        %v1417 = vpop.f32.mrb[0].mxu0
        %v1418 = vpop.f32.mrb[0].mxu0
        %v1419 = vadd.f32 0.0, %v1418
        %v1420 = vpop.f32.mrb[0].mxu0
        %1421 = vmatprep.mubr.bf16.mxu0 0
        %1422 = vmatmul.mubr.bf16.gmra.mrb[0].mxu0 %v1310
        %v1423 = vpop.f32.mrb[0].mxu0
        %v1424 = vadd.f32 0.0, %v1423
        %v1425 = vpop.f32.mrb[0].mxu0
        %v1426 = vpop.f32.mrb[0].mxu0
        %v1427 = vadd.f32 0.0, %v1426
        %v1428 = vpop.f32.mrb[0].mxu0
        %1429 = vmatprep.mubr.bf16.mxu0 0
        %1430 = vmatmul.mubr.bf16.gmra.mrb[0].mxu0 %v1311
        %v1431 = vpop.f32.mrb[0].mxu0
        %v1432 = vadd.f32 0.0, %v1431
        %v1433 = vpop.f32.mrb[0].mxu0
        %v1434 = vpop.f32.mrb[0].mxu0
        %v1435 = vadd.f32 0.0, %v1434
        %v1436 = vpop.f32.mrb[0].mxu0
        %1437 = vmatprep.mubr.bf16.mxu0 0
        %1438 = vmatmul.mubr.bf16.gmra.mrb[0].mxu0 %v1312
        %v1439 = vpop.f32.mrb[0].mxu0
        %v1440 = vadd.f32 0.0, %v1439
        %v1441 = vpop.f32.mrb[0].mxu0
        %v1442 = vpop.f32.mrb[0].mxu0
        %v1443 = vadd.f32 0.0, %v1442
        %v1444 = vpop.f32.mrb[0].mxu0
        %1445 = vmatprep.mubr.bf16.mxu0 0
        %1446 = vmatmul.mubr.bf16.gmra.mrb[0].mxu0 %v1313
        %v1447 = vpop.f32.mrb[0].mxu0
        %v1448 = vadd.f32 0.0, %v1447
        %v1449 = vpop.f32.mrb[0].mxu0
        %v1450 = vpop.f32.mrb[0].mxu0
        %v1451 = vadd.f32 0.0, %v1450
        %v1452 = vpop.f32.mrb[0].mxu0
        %1453 = vmatprep.mubr.bf16.mxu0 0
        %1454 = vmatmul.mubr.bf16.gmra.mrb[0].mxu0 %v1314
        %v1455 = vpop.f32.mrb[0].mxu0
        %v1456 = vadd.f32 0.0, %v1455
        %v1457 = vpop.f32.mrb[0].mxu0
        %v1458 = vpop.f32.mrb[0].mxu0
        %v1459 = vadd.f32 0.0, %v1458
        %v1460 = vpop.f32.mrb[0].mxu0
        %1461 = vmatprep.mubr.bf16.mxu0 0
        %1462 = vmatmul.mubr.bf16.gmra.mrb[0].mxu0 %v1315
        %v1463 = vpop.f32.mrb[0].mxu0
        %v1464 = vadd.f32 0.0, %v1463
        %v1465 = vpop.f32.mrb[0].mxu0
        %v1466 = vpop.f32.mrb[0].mxu0
        %v1467 = vadd.f32 0.0, %v1466
        %v1468 = vpop.f32.mrb[0].mxu0
        %1469 = vmatprep.mubr.bf16.mxu0 0
        %1470 = vmatmul.mubr.bf16.gmra.mrb[0].mxu0 %v1316
        %v1471 = vpop.f32.mrb[0].mxu0
        %v1472 = vadd.f32 0.0, %v1471
        %v1473 = vpop.f32.mrb[0].mxu0
        %v1474 = vpop.f32.mrb[0].mxu0
        %v1475 = vadd.f32 0.0, %v1474
        %v1476 = vpop.f32.mrb[0].mxu0
        %1477 = vdwg.mxu0
        %v1478 = vld [vmem:[#allocation15] sm:$0x1]
        %v1480 = vlaneseq
        %v1481 = vshrl.u32 %v1480, 7
        %v1482 = vsub.s32 0, %v1481
        %v1483 = vrot.slane %v1478, %v1482
        %v1485 = vmul.f32 %v1416, %v1483
        %v1486 = vmul.f32 %v1419, %v1483
        %v1487 = vmul.f32 %v1424, %v1483
        %v1488 = vmul.f32 %v1427, %v1483
        %v1489 = vmul.f32 %v1432, %v1483
        %v1490 = vmul.f32 %v1435, %v1483
        %v1491 = vmul.f32 %v1440, %v1483
        %v1492 = vmul.f32 %v1443, %v1483
        %v1493 = vmul.f32 %v1448, %v1483
        %v1494 = vmul.f32 %v1451, %v1483
        %v1495 = vmul.f32 %v1456, %v1483
        %v1496 = vmul.f32 %v1459, %v1483
        %v1497 = vmul.f32 %v1464, %v1483
        %v1498 = vmul.f32 %v1467, %v1483
        %v1499 = vmul.f32 %v1472, %v1483
        %v1500 = vmul.f32 %v1475, %v1483
        %v1501 = vld [vmem:[#allocation17] sm:$0x1]
        %v1503 = vlaneseq
        %v1504 = vshrl.u32 %v1503, 7
        %v1505 = vsub.s32 0, %v1504
        %v1506 = vrot.slane %v1501, %v1505
        %v1508 = vadd.f32 %v1485, %v1506
        %v1509 = vadd.f32 %v1486, %v1506
        %v1510 = vadd.f32 %v1487, %v1506
        %v1511 = vadd.f32 %v1488, %v1506
        %v1512 = vadd.f32 %v1489, %v1506
        %v1513 = vadd.f32 %v1490, %v1506
        %v1514 = vadd.f32 %v1491, %v1506
        %v1515 = vadd.f32 %v1492, %v1506
        %v1516 = vadd.f32 %v1493, %v1506
        %v1517 = vadd.f32 %v1494, %v1506
        %v1518 = vadd.f32 %v1495, %v1506
        %v1519 = vadd.f32 %v1496, %v1506
        %v1520 = vadd.f32 %v1497, %v1506
        %v1521 = vadd.f32 %v1498, %v1506
        %v1522 = vadd.f32 %v1499, %v1506
        %v1523 = vadd.f32 %v1500, %v1506
        %vm1524 = vcmp.ge.f32.partialorder %v1508, 0.0
        %vm1525 = vcmp.ge.f32.partialorder %v1509, 0.0
        %vm1526 = vcmp.ge.f32.partialorder %v1510, 0.0
        %vm1527 = vcmp.ge.f32.partialorder %v1511, 0.0
        %vm1528 = vcmp.ge.f32.partialorder %v1512, 0.0
        %vm1529 = vcmp.ge.f32.partialorder %v1513, 0.0
        %vm1530 = vcmp.ge.f32.partialorder %v1514, 0.0
        %vm1531 = vcmp.ge.f32.partialorder %v1515, 0.0
        %vm1532 = vcmp.ge.f32.partialorder %v1516, 0.0
        %vm1533 = vcmp.ge.f32.partialorder %v1517, 0.0
        %vm1534 = vcmp.ge.f32.partialorder %v1518, 0.0
        %vm1535 = vcmp.ge.f32.partialorder %v1519, 0.0
        %vm1536 = vcmp.ge.f32.partialorder %v1520, 0.0
        %vm1537 = vcmp.ge.f32.partialorder %v1521, 0.0
        %vm1538 = vcmp.ge.f32.partialorder %v1522, 0.0
        %vm1539 = vcmp.ge.f32.partialorder %v1523, 0.0
        %v1540 = vld [vmem:[#allocation18] sm:$0x1]
        %v1542 = vlaneseq
        %v1543 = vshrl.u32 %v1542, 7
        %v1544 = vsub.s32 0, %v1543
        %v1545 = vrot.slane %v1540, %v1544
        %v1547 = vmul.f32 %v1545, %v1508
        %v1548 = vmul.f32 %v1545, %v1509
        %v1549 = vmul.f32 %v1545, %v1510
        %v1550 = vmul.f32 %v1545, %v1511
        %v1551 = vmul.f32 %v1545, %v1512
        %v1552 = vmul.f32 %v1545, %v1513
        %v1553 = vmul.f32 %v1545, %v1514
        %v1554 = vmul.f32 %v1545, %v1515
        %v1555 = vmul.f32 %v1545, %v1516
        %v1556 = vmul.f32 %v1545, %v1517
        %v1557 = vmul.f32 %v1545, %v1518
        %v1558 = vmul.f32 %v1545, %v1519
        %v1559 = vmul.f32 %v1545, %v1520
        %v1560 = vmul.f32 %v1545, %v1521
        %v1561 = vmul.f32 %v1545, %v1522
        %v1562 = vmul.f32 %v1545, %v1523
        %v1563 = vsel %vm1524, %v1508, %v1547
        %v1564 = vsel %vm1525, %v1509, %v1548
        %v1565 = vsel %vm1526, %v1510, %v1549
        %v1566 = vsel %vm1527, %v1511, %v1550
        %v1567 = vsel %vm1528, %v1512, %v1551
        %v1568 = vsel %vm1529, %v1513, %v1552
        %v1569 = vsel %vm1530, %v1514, %v1553
        %v1570 = vsel %vm1531, %v1515, %v1554
        %v1571 = vsel %vm1532, %v1516, %v1555
        %v1572 = vsel %vm1533, %v1517, %v1556
        %v1573 = vsel %vm1534, %v1518, %v1557
        %v1574 = vsel %vm1535, %v1519, %v1558
        %v1575 = vsel %vm1536, %v1520, %v1559
        %v1576 = vsel %vm1537, %v1521, %v1560
        %v1577 = vsel %vm1538, %v1522, %v1561
        %v1578 = vsel %vm1539, %v1523, %v1562
        %v1579 = vpack.c.bf16 %v1564, %v1563
        %v1580 = vpack.c.bf16 %v1566, %v1565
        %v1581 = vpack.c.bf16 %v1568, %v1567
        %v1582 = vpack.c.bf16 %v1570, %v1569
        %v1583 = vpack.c.bf16 %v1572, %v1571
        %v1584 = vpack.c.bf16 %v1574, %v1573
        %v1585 = vpack.c.bf16 %v1576, %v1575
        %v1586 = vpack.c.bf16 %v1578, %v1577
        %v1595 = vunpack.c.l.b16 %v1579
        %v1596 = vunpack.c.h.b16 %v1579
        %v1597 = vunpack.c.l.b16 %v1580
        %v1598 = vunpack.c.h.b16 %v1580
        %v1599 = vunpack.c.l.b16 %v1581
        %v1600 = vunpack.c.h.b16 %v1581
        %v1601 = vunpack.c.l.b16 %v1582
        %v1602 = vunpack.c.h.b16 %v1582
        %v1603 = vunpack.c.l.b16 %v1583
        %v1604 = vunpack.c.h.b16 %v1583
        %v1605 = vunpack.c.l.b16 %v1584
        %v1606 = vunpack.c.h.b16 %v1584
        %v1607 = vunpack.c.l.b16 %v1585
        %v1608 = vunpack.c.h.b16 %v1585
        %v1609 = vunpack.c.l.b16 %v1586
        %v1610 = vunpack.c.h.b16 %v1586
        %v1611 = vpack.c.b16 %v1595, %v1595
        %v1612 = vpack.c.b16 %v1596, %v1596
        %v1613 = vpack.c.b16 %v1597, %v1597
        %v1614 = vpack.c.b16 %v1598, %v1598
        %v1615 = vpack.c.b16 %v1599, %v1599
        %v1616 = vpack.c.b16 %v1600, %v1600
        %v1617 = vpack.c.b16 %v1601, %v1601
        %v1618 = vpack.c.b16 %v1602, %v1602
        %v1619 = vpack.c.b16 %v1603, %v1603
        %v1620 = vpack.c.b16 %v1604, %v1604
        %v1621 = vpack.c.b16 %v1605, %v1605
        %v1622 = vpack.c.b16 %v1606, %v1606
        %v1623 = vpack.c.b16 %v1607, %v1607
        %v1624 = vpack.c.b16 %v1608, %v1608
        %v1625 = vpack.c.b16 %v1609, %v1609
        %v1626 = vpack.c.b16 %v1610, %v1610
        %1643 = vst [vmem:[%s612] sm:$0xf] %v1611
        %1644 = vst [vmem:[%s612 + $0x4] sm:$0xf] %v1612
        %1645 = vst [vmem:[%s612 + $0x8] sm:$0xf] %v1613
        %1646 = vst [vmem:[%s612 + $0xc] sm:$0xf] %v1614
        %1647 = vst [vmem:[%s612 + $0x10] sm:$0xf] %v1615
        %1648 = vst [vmem:[%s612 + $0x14] sm:$0xf] %v1616
        %1649 = vst [vmem:[%s612 + $0x18] sm:$0xf] %v1617
        %1650 = vst [vmem:[%s612 + $0x1c] sm:$0xf] %v1618
        %1651 = vst [vmem:[%s612 + $0x20] sm:$0xf] %v1619
        %1652 = vst [vmem:[%s612 + $0x24] sm:$0xf] %v1620
        %1653 = vst [vmem:[%s612 + $0x28] sm:$0xf] %v1621
        %1654 = vst [vmem:[%s612 + $0x2c] sm:$0xf] %v1622
        %1655 = vst [vmem:[%s612 + $0x30] sm:$0xf] %v1623
        %1656 = vst [vmem:[%s612 + $0x34] sm:$0xf] %v1624
        %1657 = vst [vmem:[%s612 + $0x38] sm:$0xf] %v1625
        %1658 = vst [vmem:[%s612 + $0x3c] sm:$0xf] %v1626
        %s1659 = sand.u32 %s284, 1
        %s1660 = scalar_lea.sflag [#allocation5], %s1659
        %s1661 = sand.u32 %s284, 1
        %s1662 = smul.addr %s1661, 64
        %s1663 = scalar_lea.vmem [#allocation20], %s1662
        // Predicated region
        $region101: #{tpu_custom_call.1} parent=59 // pred_check
          %p1664 = pneg %p294
        $region102: #{tpu_custom_call.1} parent=59 // pred_check_branch
          %1666 = sbr.rel (%p1664) target = $region104
        $region103: #{tpu_custom_call.1} parent=59 // pred_region
          #allocation26 [shape = 'u32[6]{0}', space=smem, size = 0x18, scoped, tag = 'DMA stride descriptor']
          %s1667 = smul.u32 2, %s38
          %s1668 = smul.u32 4, %s39
          %s1670 = ssub.s32 1024, 1024
          %1671 = vsyncadd %s1660, %s1670
          %s1672 = smul.addr %s1668, 2
          %s1673 = smul.addr %s1667, 32
          %s1674 = sadd.s32 %s1672, %s1673
          %s1675 = smul.addr %s1674, 64
          %s1676 = scalar_lea.hbm %s10, %s1675
          %s1678 = sshll.u32 1, 14
          %s1679 = sxor.u32 4294967295, %s1678
          %s1682 = sshll.u32 7, 18
          %s1683 = sxor.u32 4294967295, %s1682
          %s1684 = sand.u32 0, %s1683
          %s1686 = sor.u32 %s1684, 0
          %s1688 = sshll.u32 3, 24
          %s1689 = sxor.u32 4294967295, %s1688
          %s1690 = sand.u32 %s1686, %s1689
          %s1692 = sor.u32 %s1690, 0
          %s1693 = sshll.u32 %s1663, 4
          %s1694 = int_to_ptr.vmem [resolvable:$true] %s1693
          %1700 = sst [smem:[#allocation26]] 512
          %s1701 = scalar_lea.smem [#allocation26], 1
          %1702 = sst [smem:[%s1701]] 2048
          %s1703 = scalar_lea.smem [#allocation26], 2
          %1704 = sst [smem:[%s1703]] 8
          %s1705 = scalar_lea.smem [#allocation26], 3
          %1706 = sst [smem:[%s1705]] 64
          %s1707 = scalar_lea.smem [#allocation26], 4
          %1708 = sst [smem:[%s1707]] 64
          %s1709 = scalar_lea.smem [#allocation26], 5
          %1710 = sst [smem:[%s1709]] 4
          %1712 = dma.general %s1694, 1024, %s1676, %s1660, [#allocation25], [#allocation26], %s1692, 0
        $region104: #{tpu_custom_call.1} parent=59 // pred_fallthru
          _
      $region60: #{tpu_custom_call.1} parent=5 // pred_fallthru
        _
      %p1713 = scmp.le.s32.totalorder 2, %s29
      // Predicated region
      $region105: #{tpu_custom_call.1} parent=5 // pred_check
        %p1714 = pneg %p1713
      $region106: #{tpu_custom_call.1} parent=5 // pred_check_branch
        %1716 = sbr.rel (%p1714) target = $region108
      $region107: #{tpu_custom_call.1} parent=5 // pred_region
        %s1717 = ssub.s32 %s29, 2
        // Predicated region
        $region109: #{tpu_custom_call.1} parent=107 // pred_check
          %p1718 = pneg %p300
        $region110: #{tpu_custom_call.1} parent=107 // pred_check_branch
          %1720 = sbr.rel (%p1718) target = $region112
        $region111: #{tpu_custom_call.1} parent=107 // pred_region
          %s1721 = sand.u32 %s285, 1
          %s1722 = scalar_lea.sflag [#allocation5], %s1721
          %s1723 = sand.u32 %s285, 1
          %s1724 = smul.addr %s1723, 64
          %s1725 = scalar_lea.vmem [#allocation20], %s1724
          %1726 = dma.done %s1722, 1024
        $region112: #{tpu_custom_call.1} parent=107 // pred_fallthru
          _
      $region108: #{tpu_custom_call.1} parent=5 // pred_fallthru
        _
    $region6: #{tpu_custom_call.1} parent=1 // loop_footer
      %s33 = sadd.s32 1, %s29
    $region7: #{tpu_custom_call.1} parent=1 // loop_footer_branch
      %28 = sbr.rel target = $region3
    $region8: #{tpu_custom_call.1} parent=1 // loop_exit
      _
    %1727 = vsyncpa [#allocation4], 1
    %s1728 = scalar_lea.sflag [#allocation4], 1
    %1729 = vsyncpa %s1728, 1
    %1730 = vsyncpa [#allocation7], 1
    %s1731 = scalar_lea.sflag [#allocation7], 1
    %1732 = vsyncpa %s1731, 1
    %1733 = vsyncpa [#allocation10], 1
    %1734 = vsyncpa [#allocation13], 1
    %1735 = vsyncpa [#allocation16], 1
    %1736 = vsyncpa [#allocation19], 1
    %1737 = vsyncpa [#allocation5], 1
    %s1738 = scalar_lea.sflag [#allocation5], 1
    %1739 = vsyncpa %s1738, 1

</llo_original>
